<compile_context>
chip_gen: v7x
topology: tpu7x:2x2x1
jax: 0.10.0
libtpu: 0.0.40
codegen_flags: <defaults>
</compile_context>

<pallas_src>
import jax
import jax.numpy as jnp
from jax import lax
from jax.experimental import pallas as pl
from jax.experimental.pallas import tpu as pltpu


# Marginal ordering (m): 0=T total, 1=RF first row, 2=RL last row,
# 3=CF first col, 4=CL last col, 5=x[0,0], 6=x[0,W-1], 7=x[H-1,0], 8=x[H-1,W-1]
# Tap ordering (p = 3*ky + kx) matches the im2col (ky, kx, c) layout.
_A_TAPS_FROM_MARGINALS = [
    # T   RF  RL  CF  CL  x00 x0W xH0 xHW
    [1.0, 0., -1., 0., -1., 0., 0., 0., 1.],   # (ky=0, kx=0)
    [1.0, 0., -1., 0.,  0., 0., 0., 0., 0.],   # (ky=0, kx=1)
    [1.0, 0., -1., -1., 0., 0., 0., 1., 0.],   # (ky=0, kx=2)
    [1.0, 0.,  0., 0., -1., 0., 0., 0., 0.],   # (ky=1, kx=0)
    [1.0, 0.,  0., 0.,  0., 0., 0., 0., 0.],   # (ky=1, kx=1)
    [1.0, 0.,  0., -1., 0., 0., 0., 0., 0.],   # (ky=1, kx=2)
    [1.0, -1., 0., 0., -1., 0., 1., 0., 0.],   # (ky=2, kx=0)
    [1.0, -1., 0., 0.,  0., 0., 0., 0., 0.],   # (ky=2, kx=1)
    [1.0, -1., 0., -1., 0., 1., 0., 0., 0.],   # (ky=2, kx=2)
]


def dsc_kernel(x_ref, wfold_ref, bconv_ref, w1_ref, b1_ref,
               gamma_ref, beta_ref, w2_ref, b2_ref, out_ref, acc_ref):
    t = pl.program_id(0)
    n_t = pl.num_programs(0)
    _, C, TH, W = x_ref.shape

    @pl.when(t == 0)
    def _init():
        acc_ref[...] = jnp.zeros_like(acc_ref)

    # ---- streaming phase: accumulate spatial marginals of the raw input ----
    tile = x_ref[...].astype(jnp.float32)                  # (B, C, TH, W)
    col_sums = jnp.sum(tile, axis=2)                       # (B, C, W) row-sum in tile
    acc_ref[:, 0 * C:1 * C] += jnp.sum(col_sums, axis=2)   # T  (total)
    acc_ref[:, 3 * C:4 * C] += col_sums[:, :, 0]           # CF (first col)
    acc_ref[:, 4 * C:5 * C] += col_sums[:, :, W - 1]       # CL (last col)

    @pl.when(t == 0)
    def _first_row():
        row0 = tile[:, :, 0, :]                             # (B, C, W)
        acc_ref[:, 1 * C:2 * C] += jnp.sum(row0, axis=2)    # RF
        acc_ref[:, 5 * C:6 * C] += row0[:, :, 0]            # x[0,0]
        acc_ref[:, 6 * C:7 * C] += row0[:, :, W - 1]        # x[0,W-1]

    @pl.when(t == n_t - 1)
    def _last_and_tail():
        rowl = tile[:, :, TH - 1, :]                        # (B, C, W)
        acc_ref[:, 2 * C:3 * C] += jnp.sum(rowl, axis=2)    # RL
        acc_ref[:, 7 * C:8 * C] += rowl[:, :, 0]            # x[H-1,0]
        acc_ref[:, 8 * C:9 * C] += rowl[:, :, W - 1]        # x[H-1,W-1]

        hp = lax.Precision.HIGHEST
        marg = acc_ref[...]                                  # (B, 9C)

        # fused GAP o (1x1 conv) o (3x3 conv): one tiny matmul with the
        # inclusion-exclusion + 1/HW already folded into wfold.
        g = jnp.dot(marg, wfold_ref[...], precision=hp,
                    preferred_element_type=jnp.float32) + bconv_ref[...]   # (B,128)

        # domain classifier; hidden lane-padded 100 -> 128 with zeros
        z = jnp.dot(g, w1_ref[...], precision=hp,
                    preferred_element_type=jnp.float32) + b1_ref[...]      # (B,128)

        # BatchNorm1d in training mode (batch stats, biased variance)
        mu = jnp.mean(z, axis=0, keepdims=True)
        var = jnp.mean((z - mu) * (z - mu), axis=0, keepdims=True)
        zn = (z - mu) * lax.rsqrt(var + 1e-5)
        zn = zn * gamma_ref[...] + beta_ref[...]

        zr = jnp.maximum(zn, 0.0)                                          # ReLU

        logits = jnp.dot(zr, w2_ref[...], precision=hp,
                         preferred_element_type=jnp.float32) + b2_ref[...]  # (B,2)

        # LogSoftmax(dim=1)
        mx = jnp.max(logits, axis=1, keepdims=True)
        lse = jnp.log(jnp.sum(jnp.exp(logits - mx), axis=1, keepdims=True)) + mx
        out_ref[...] = logits - lse


def _pick_tile_h(H, B, C, W, itemsize):
    """Largest divisor of H that is a multiple of 8, sized so one input tile
    costs <= ~4 MiB of *lane-padded* VMEM (W padded to a multiple of 128).
    Double-buffered that is <= ~8 MiB, well inside every generation's default
    scoped-VMEM limit (v5e 16 MiB, v6e/v7x 32 MiB; v7x 64 MiB physical)."""
    budget = 4 << 20
    w_pad = -(-W // 128) * 128
    per_row = max(1, B * C * w_pad * itemsize)
    cap = min(H, max(8, budget // per_row))
    cap -= cap % 8
    for t in range(cap, 7, -8):
        if H % t == 0:
            return t
    return H


def dsc_classifier_forward(x_nchw, params, *, tile_h=None):
    B, C, H, W = x_nchw.shape
    HW = H * W
    C9 = 9 * C
    HID = 128                      # lane-padded hidden width (module uses 100)
    f32 = jnp.float32
    hp = lax.Precision.HIGHEST

    # --- trace-time fold: (3x3 conv) o (1x1 conv) -> (9C, 128) over im2col taps
    wdw = jnp.transpose(params["dw_w"], (2, 3, 1, 0)).reshape(C9, C).astype(f32)
    wpw = jnp.transpose(params["pw_w"][:, :, 0, 0], (1, 0)).astype(f32)    # (C, 128)
    w_conv = jnp.dot(wdw, wpw, precision=hp)                               # (9C, 128)
    b_conv = (jnp.dot(params["dw_b"].reshape(1, C).astype(f32), wpw, precision=hp)
              + params["pw_b"].reshape(1, 128).astype(f32))                # (1, 128)

    # --- fold inclusion-exclusion (marginals -> tap sums) and 1/HW into the W
    A = jnp.array(_A_TAPS_FROM_MARGINALS, f32)                             # (9 taps, 9 marg)
    w_fold = (jnp.einsum("pm,pco->mco", A, w_conv.reshape(9, C, 128),
                         precision=hp) / float(HW)).reshape(C9, 128)       # (9C, 128)

    # --- classifier tail, lane-padded 100 -> 128 (zero padding is exact)
    w1 = jnp.zeros((128, HID), f32).at[:, :100].set(jnp.transpose(params["fc1_w"]))
    b1 = jnp.zeros((1, HID), f32).at[:, :100].set(params["fc1_b"].reshape(1, 100))
    gamma = jnp.zeros((1, HID), f32).at[:, :100].set(params["bn_gamma"].reshape(1, 100))
    beta = jnp.zeros((1, HID), f32).at[:, :100].set(params["bn_beta"].reshape(1, 100))
    w2 = jnp.zeros((HID, 2), f32).at[:100, :].set(jnp.transpose(params["fc2_w"]))
    b2 = params["fc2_b"].reshape(1, 2).astype(f32)

    # --- grid over row tiles of the raw NCHW input (reduction axis -> arbitrary)
    itemsize = jnp.dtype(x_nchw.dtype).itemsize
    if tile_h is None:
        tile_h = _pick_tile_h(H, B, C, W, itemsize)
    assert H % tile_h == 0 and (tile_h % 8 == 0 or tile_h == H), tile_h
    n_tiles = H // tile_h

    const2 = lambda t: (0, 0)      # resident weight blocks (not re-fetched)

    grid_spec = pltpu.PrefetchScalarGridSpec(
        num_scalar_prefetch=0,
        grid=(n_tiles,),
        in_specs=[
            pl.BlockSpec((B, C, tile_h, W), lambda t: (0, 0, t, 0)),  # x (streamed)
            pl.BlockSpec((C9, 128), const2),                          # folded conv W
            pl.BlockSpec((1, 128), const2),                           # folded conv b
            pl.BlockSpec((128, HID), const2),                         # fc1 W (padded)
            pl.BlockSpec((1, HID), const2),                           # fc1 b
            pl.BlockSpec((1, HID), const2),                           # bn gamma
            pl.BlockSpec((1, HID), const2),                           # bn beta
            pl.BlockSpec((HID, 2), const2),                           # fc2 W (padded)
            pl.BlockSpec((1, 2), const2),                             # fc2 b
        ],
        out_specs=pl.BlockSpec((B, 2), lambda t: (0, 0)),             # resident output
        scratch_shapes=[pltpu.VMEM((B, C9), jnp.float32)],            # marginal accum
    )

    return pl.pallas_call(
        dsc_kernel,
        out_shape=jax.ShapeDtypeStruct((B, 2), jnp.float32),
        grid_spec=grid_spec,
        compiler_params=pltpu.CompilerParams(
            dimension_semantics=("arbitrary",)),
    )(x_nchw, w_fold, b_conv, w1, b1, gamma, beta, w2, b2)


def init_params(key, in_channels):
    C = in_channels
    ks = jax.random.split(key, 8)

    def u(k, shape, fan_in):
        s = 1.0 / (fan_in ** 0.5)
        return jax.random.uniform(k, shape, jnp.float32, -s, s)

    return {
        "dw_w": u(ks[0], (C, C, 3, 3), C * 9),      # Conv2d(C, C, 3, padding=1)
        "dw_b": u(ks[1], (C,), C * 9),
        "pw_w": u(ks[2], (128, C, 1, 1), C),        # Conv2d(C, 128, 1)
        "pw_b": u(ks[3], (128,), C),
        "fc1_w": u(ks[4], (100, 128), 128),         # Linear(128, 100)
        "fc1_b": u(ks[5], (100,), 128),
        "bn_gamma": jnp.ones((100,), jnp.float32),  # BatchNorm1d(100)
        "bn_beta": jnp.zeros((100,), jnp.float32),
        "fc2_w": u(ks[6], (2, 100), 100),           # Linear(100, 2)
        "fc2_b": u(ks[7], (2,), 100),
    }


def reference_forward(x_nchw, params):
    """Pure-JAX reference mirroring the PyTorch forward (training-mode BN)."""
    y = lax.conv_general_dilated(x_nchw, params["dw_w"], (1, 1), "SAME",
                                 dimension_numbers=("NCHW", "OIHW", "NCHW"))
    y = y + params["dw_b"][None, :, None, None]
    y = lax.conv_general_dilated(y, params["pw_w"], (1, 1), "SAME",
                                 dimension_numbers=("NCHW", "OIHW", "NCHW"))
    y = y + params["pw_b"][None, :, None, None]
    g = jnp.mean(y, axis=(2, 3))                      # AdaptiveAvgPool2d(1) + flatten
    z = g @ params["fc1_w"].T + params["fc1_b"]
    mu = jnp.mean(z, axis=0)
    var = jnp.mean((z - mu) ** 2, axis=0)
    zn = (z - mu) / jnp.sqrt(var + 1e-5) * params["bn_gamma"] + params["bn_beta"]
    zr = jnp.maximum(zn, 0.0)
    logits = zr @ params["fc2_w"].T + params["fc2_b"]
    return jax.nn.log_softmax(logits, axis=1)


if __name__ == "__main__":
    key = jax.random.PRNGKey(0)
    kx, kp, kx2, kp2 = jax.random.split(key, 4)

    fwd = jax.jit(dsc_classifier_forward, static_argnames=("tile_h",))

    # --- primary shape from the spec
    B, C, H, W = 2, 4, 16, 16
    x = jax.random.normal(kx, (B, C, H, W), jnp.float32)
    params = init_params(kp, C)
    ref = jax.block_until_ready(reference_forward(x, params))

    out = jax.block_until_ready(fwd(x, params))                   # auto tile (single step)
    assert out.shape == (B, 2), out.shape
    assert jnp.allclose(out, ref, atol=1e-4, rtol=1e-4), (out, ref)

    out_multi = jax.block_until_ready(fwd(x, params, tile_h=8))   # multi-step accumulator
    assert jnp.allclose(out_multi, ref, atol=1e-4, rtol=1e-4), (out_multi, ref)

    # --- odd channel / spatial shape to exercise the marginal bookkeeping
    B2, C2, H2, W2 = 3, 5, 24, 20
    x2 = jax.random.normal(kx2, (B2, C2, H2, W2), jnp.float32)
    params2 = init_params(kp2, C2)
    ref2 = jax.block_until_ready(reference_forward(x2, params2))
    out2 = jax.block_until_ready(fwd(x2, params2, tile_h=8))
    assert jnp.allclose(out2, ref2, atol=1e-4, rtol=1e-4), (out2, ref2)

    print("KERNEL_OK")
</pallas_src>

<mosaic_0001>
module attributes {stable_mosaic.version = 11 : i64} {
  func.func @dsc_kernel(%arg0: i32, %arg1: memref<2x4x16x16xf32, #tpu.memory_space<vmem>>, %arg2: memref<36x128xf32, #tpu.memory_space<vmem>>, %arg3: memref<1x128xf32, #tpu.memory_space<vmem>>, %arg4: memref<128x128xf32, #tpu.memory_space<vmem>>, %arg5: memref<1x128xf32, #tpu.memory_space<vmem>>, %arg6: memref<1x128xf32, #tpu.memory_space<vmem>>, %arg7: memref<1x128xf32, #tpu.memory_space<vmem>>, %arg8: memref<128x2xf32, #tpu.memory_space<vmem>>, %arg9: memref<1x2xf32, #tpu.memory_space<vmem>>, %arg10: memref<2x2xf32, #tpu.memory_space<vmem>>, %arg11: memref<2x36xf32, #tpu.memory_space<vmem>>) attributes {dimension_semantics = [#tpu.dimension_semantics<arbitrary>], iteration_bounds = array<i64: 1>, scalar_prefetch = 0 : i64, scratch_operands = 1 : i64, tpu.core_type = #tpu.core_type<tc>, window_params = [{transform_indices = @transform_0, window_bounds = array<i64: 2, 4, 16, 16>}, {pipeline_mode = #tpu.pipeline_mode<synchronous>, transform_indices = @transform_1, window_bounds = array<i64: 36, 128>}, {pipeline_mode = #tpu.pipeline_mode<synchronous>, transform_indices = @transform_2, window_bounds = array<i64: 1, 128>}, {pipeline_mode = #tpu.pipeline_mode<synchronous>, transform_indices = @transform_3, window_bounds = array<i64: 128, 128>}, {pipeline_mode = #tpu.pipeline_mode<synchronous>, transform_indices = @transform_4, window_bounds = array<i64: 1, 128>}, {pipeline_mode = #tpu.pipeline_mode<synchronous>, transform_indices = @transform_5, window_bounds = array<i64: 1, 128>}, {pipeline_mode = #tpu.pipeline_mode<synchronous>, transform_indices = @transform_6, window_bounds = array<i64: 1, 128>}, {pipeline_mode = #tpu.pipeline_mode<synchronous>, transform_indices = @transform_7, window_bounds = array<i64: 128, 2>}, {pipeline_mode = #tpu.pipeline_mode<synchronous>, transform_indices = @transform_8, window_bounds = array<i64: 1, 2>}, {pipeline_mode = #tpu.pipeline_mode<synchronous>, transform_indices = @transform_9, window_bounds = array<i64: 2, 2>}]} {
    %c0_i32 = arith.constant 0 : i32
    %0 = arith.cmpi eq, %arg0, %c0_i32 : i32
    %1 = arith.extui %0 : i1 to i32
    %c0_i32_0 = arith.constant 0 : i32
    %2 = arith.cmpi ne, %1, %c0_i32_0 : i32
    scf.if %2 {
      %cst_19 = arith.constant 0.000000e+00 : f32
      %25 = vector.broadcast %cst_19 : f32 to vector<2x36xf32>
      %c0_20 = arith.constant 0 : index
      %c0_21 = arith.constant 0 : index
      %26 = vector.load %arg11[%c0_20, %c0_21] : memref<2x36xf32, #tpu.memory_space<vmem>>, vector<2x36xf32>
      tpu.vector_store %arg11[%c0_20, %c0_21], %25 {strides = array<i32>} : memref<2x36xf32, #tpu.memory_space<vmem>>, vector<2x36xf32>,
    } else {
    }
    %c0 = arith.constant 0 : index
    %c0_1 = arith.constant 0 : index
    %c0_2 = arith.constant 0 : index
    %c0_3 = arith.constant 0 : index
    %3 = vector.load %arg1[%c0, %c0_1, %c0_2, %c0_3] : memref<2x4x16x16xf32, #tpu.memory_space<vmem>>, vector<2x4x16x16xf32>
    %cst = arith.constant dense<0.000000e+00> : vector<2x4x16xf32>
    %4 = vector.multi_reduction <add>, %3, %cst [2] : vector<2x4x16x16xf32> to vector<2x4x16xf32>
    %c0_4 = arith.constant 0 : index
    %c0_5 = arith.constant 0 : index
    %5 = vector.load %arg11[%c0_4, %c0_5] : memref<2x36xf32, #tpu.memory_space<vmem>>, vector<2x4xf32>
    %cst_6 = arith.constant dense<0.000000e+00> : vector<2x4xf32>
    %6 = vector.multi_reduction <add>, %4, %cst_6 [2] : vector<2x4x16xf32> to vector<2x4xf32>
    %7 = arith.addf %5, %6 : vector<2x4xf32>
    %c0_7 = arith.constant 0 : index
    %c0_8 = arith.constant 0 : index
    %8 = vector.load %arg11[%c0_7, %c0_8] : memref<2x36xf32, #tpu.memory_space<vmem>>, vector<2x4xf32>
    tpu.vector_store %arg11[%c0_7, %c0_8], %7 {strides = array<i32>} : memref<2x36xf32, #tpu.memory_space<vmem>>, vector<2x4xf32>,
    %c0_9 = arith.constant 0 : index
    %c12 = arith.constant 12 : index
    %9 = vector.load %arg11[%c0_9, %c12] : memref<2x36xf32, #tpu.memory_space<vmem>>, vector<2x4xf32>
    %10 = vector.extract_strided_slice %4 {offsets = [0, 0, 0], sizes = [2, 4, 1], strides = [1, 1, 1]} : vector<2x4x16xf32> to vector<2x4x1xf32>
    %11 = vector.shape_cast %10 : vector<2x4x1xf32> to vector<2x4xf32>
    %12 = arith.addf %9, %11 : vector<2x4xf32>
    %c0_10 = arith.constant 0 : index
    %c12_11 = arith.constant 12 : index
    %13 = vector.load %arg11[%c0_10, %c12_11] : memref<2x36xf32, #tpu.memory_space<vmem>>, vector<2x4xf32>
    tpu.vector_store %arg11[%c0_10, %c12_11], %12 {strides = array<i32>} : memref<2x36xf32, #tpu.memory_space<vmem>>, vector<2x4xf32>,
    %c0_12 = arith.constant 0 : index
    %c16 = arith.constant 16 : index
    %14 = vector.load %arg11[%c0_12, %c16] : memref<2x36xf32, #tpu.memory_space<vmem>>, vector<2x4xf32>
    %15 = vector.extract_strided_slice %4 {offsets = [0, 0, 15], sizes = [2, 4, 1], strides = [1, 1, 1]} : vector<2x4x16xf32> to vector<2x4x1xf32>
    %16 = vector.shape_cast %15 : vector<2x4x1xf32> to vector<2x4xf32>
    %17 = arith.addf %14, %16 : vector<2x4xf32>
    %c0_13 = arith.constant 0 : index
    %c16_14 = arith.constant 16 : index
    %18 = vector.load %arg11[%c0_13, %c16_14] : memref<2x36xf32, #tpu.memory_space<vmem>>, vector<2x4xf32>
    tpu.vector_store %arg11[%c0_13, %c16_14], %17 {strides = array<i32>} : memref<2x36xf32, #tpu.memory_space<vmem>>, vector<2x4xf32>,
    %c0_i32_15 = arith.constant 0 : i32
    %19 = arith.cmpi eq, %arg0, %c0_i32_15 : i32
    %20 = arith.extui %19 : i1 to i32
    %c0_i32_16 = arith.constant 0 : i32
    %21 = arith.cmpi ne, %20, %c0_i32_16 : i32
    scf.if %21 {
      %25 = vector.extract_strided_slice %3 {offsets = [0, 0, 0, 0], sizes = [2, 4, 1, 16], strides = [1, 1, 1, 1]} : vector<2x4x16x16xf32> to vector<2x4x1x16xf32>
      %26 = vector.shape_cast %25 : vector<2x4x1x16xf32> to vector<2x4x16xf32>
      %c0_19 = arith.constant 0 : index
      %c4 = arith.constant 4 : index
      %27 = vector.load %arg11[%c0_19, %c4] : memref<2x36xf32, #tpu.memory_space<vmem>>, vector<2x4xf32>
      %cst_20 = arith.constant dense<0.000000e+00> : vector<2x4xf32>
      %28 = vector.multi_reduction <add>, %26, %cst_20 [2] : vector<2x4x16xf32> to vector<2x4xf32>
      %29 = arith.addf %27, %28 : vector<2x4xf32>
      %c0_21 = arith.constant 0 : index
      %c4_22 = arith.constant 4 : index
      %30 = vector.load %arg11[%c0_21, %c4_22] : memref<2x36xf32, #tpu.memory_space<vmem>>, vector<2x4xf32>
      tpu.vector_store %arg11[%c0_21, %c4_22], %29 {strides = array<i32>} : memref<2x36xf32, #tpu.memory_space<vmem>>, vector<2x4xf32>,
      %c0_23 = arith.constant 0 : index
      %c20 = arith.constant 20 : index
      %31 = vector.load %arg11[%c0_23, %c20] : memref<2x36xf32, #tpu.memory_space<vmem>>, vector<2x4xf32>
      %32 = vector.extract_strided_slice %26 {offsets = [0, 0, 0], sizes = [2, 4, 1], strides = [1, 1, 1]} : vector<2x4x16xf32> to vector<2x4x1xf32>
      %33 = vector.shape_cast %32 : vector<2x4x1xf32> to vector<2x4xf32>
      %34 = arith.addf %31, %33 : vector<2x4xf32>
      %c0_24 = arith.constant 0 : index
      %c20_25 = arith.constant 20 : index
      %35 = vector.load %arg11[%c0_24, %c20_25] : memref<2x36xf32, #tpu.memory_space<vmem>>, vector<2x4xf32>
      tpu.vector_store %arg11[%c0_24, %c20_25], %34 {strides = array<i32>} : memref<2x36xf32, #tpu.memory_space<vmem>>, vector<2x4xf32>,
      %c0_26 = arith.constant 0 : index
      %c24 = arith.constant 24 : index
      %36 = vector.load %arg11[%c0_26, %c24] : memref<2x36xf32, #tpu.memory_space<vmem>>, vector<2x4xf32>
      %37 = vector.extract_strided_slice %26 {offsets = [0, 0, 15], sizes = [2, 4, 1], strides = [1, 1, 1]} : vector<2x4x16xf32> to vector<2x4x1xf32>
      %38 = vector.shape_cast %37 : vector<2x4x1xf32> to vector<2x4xf32>
      %39 = arith.addf %36, %38 : vector<2x4xf32>
      %c0_27 = arith.constant 0 : index
      %c24_28 = arith.constant 24 : index
      %40 = vector.load %arg11[%c0_27, %c24_28] : memref<2x36xf32, #tpu.memory_space<vmem>>, vector<2x4xf32>
      tpu.vector_store %arg11[%c0_27, %c24_28], %39 {strides = array<i32>} : memref<2x36xf32, #tpu.memory_space<vmem>>, vector<2x4xf32>,
    } else {
    }
    %c0_i32_17 = arith.constant 0 : i32
    %22 = arith.cmpi eq, %arg0, %c0_i32_17 : i32
    %23 = arith.extui %22 : i1 to i32
    %c0_i32_18 = arith.constant 0 : i32
    %24 = arith.cmpi ne, %23, %c0_i32_18 : i32
    scf.if %24 {
      %25 = vector.extract_strided_slice %3 {offsets = [0, 0, 15, 0], sizes = [2, 4, 1, 16], strides = [1, 1, 1, 1]} : vector<2x4x16x16xf32> to vector<2x4x1x16xf32>
      %26 = vector.shape_cast %25 : vector<2x4x1x16xf32> to vector<2x4x16xf32>
      %c0_19 = arith.constant 0 : index
      %c8 = arith.constant 8 : index
      %27 = vector.load %arg11[%c0_19, %c8] : memref<2x36xf32, #tpu.memory_space<vmem>>, vector<2x4xf32>
      %cst_20 = arith.constant dense<0.000000e+00> : vector<2x4xf32>
      %28 = vector.multi_reduction <add>, %26, %cst_20 [2] : vector<2x4x16xf32> to vector<2x4xf32>
      %29 = arith.addf %27, %28 : vector<2x4xf32>
      %c0_21 = arith.constant 0 : index
      %c8_22 = arith.constant 8 : index
      %30 = vector.load %arg11[%c0_21, %c8_22] : memref<2x36xf32, #tpu.memory_space<vmem>>, vector<2x4xf32>
      tpu.vector_store %arg11[%c0_21, %c8_22], %29 {strides = array<i32>} : memref<2x36xf32, #tpu.memory_space<vmem>>, vector<2x4xf32>,
      %c0_23 = arith.constant 0 : index
      %c28 = arith.constant 28 : index
      %31 = vector.load %arg11[%c0_23, %c28] : memref<2x36xf32, #tpu.memory_space<vmem>>, vector<2x4xf32>
      %32 = vector.extract_strided_slice %26 {offsets = [0, 0, 0], sizes = [2, 4, 1], strides = [1, 1, 1]} : vector<2x4x16xf32> to vector<2x4x1xf32>
      %33 = vector.shape_cast %32 : vector<2x4x1xf32> to vector<2x4xf32>
      %34 = arith.addf %31, %33 : vector<2x4xf32>
      %c0_24 = arith.constant 0 : index
      %c28_25 = arith.constant 28 : index
      %35 = vector.load %arg11[%c0_24, %c28_25] : memref<2x36xf32, #tpu.memory_space<vmem>>, vector<2x4xf32>
      tpu.vector_store %arg11[%c0_24, %c28_25], %34 {strides = array<i32>} : memref<2x36xf32, #tpu.memory_space<vmem>>, vector<2x4xf32>,
      %c0_26 = arith.constant 0 : index
      %c32 = arith.constant 32 : index
      %36 = vector.load %arg11[%c0_26, %c32] : memref<2x36xf32, #tpu.memory_space<vmem>>, vector<2x4xf32>
      %37 = vector.extract_strided_slice %26 {offsets = [0, 0, 15], sizes = [2, 4, 1], strides = [1, 1, 1]} : vector<2x4x16xf32> to vector<2x4x1xf32>
      %38 = vector.shape_cast %37 : vector<2x4x1xf32> to vector<2x4xf32>
      %39 = arith.addf %36, %38 : vector<2x4xf32>
      %c0_27 = arith.constant 0 : index
      %c32_28 = arith.constant 32 : index
      %40 = vector.load %arg11[%c0_27, %c32_28] : memref<2x36xf32, #tpu.memory_space<vmem>>, vector<2x4xf32>
      tpu.vector_store %arg11[%c0_27, %c32_28], %39 {strides = array<i32>} : memref<2x36xf32, #tpu.memory_space<vmem>>, vector<2x4xf32>,
      %c0_29 = arith.constant 0 : index
      %c0_30 = arith.constant 0 : index
      %41 = vector.load %arg11[%c0_29, %c0_30] : memref<2x36xf32, #tpu.memory_space<vmem>>, vector<2x36xf32>
      %c0_31 = arith.constant 0 : index
      %c0_32 = arith.constant 0 : index
      %42 = vector.load %arg2[%c0_31, %c0_32] : memref<36x128xf32, #tpu.memory_space<vmem>>, vector<36x128xf32>
      %cst_33 = arith.constant dense<0.000000e+00> : vector<2x128xf32>
      %43 = tpu.matmul %41, %42, %cst_33 {dimension_numbers = #tpu.dot_dimension_numbers<[1], [0], [0], [1], [0, 0, 1, 1], [], []>, precision = #tpu.contract_precision<fp32>} : vector<2x36xf32>, vector<36x128xf32>, vector<2x128xf32> -> vector<2x128xf32>
      %c0_34 = arith.constant 0 : index
      %c0_35 = arith.constant 0 : index
      %44 = vector.load %arg3[%c0_34, %c0_35] : memref<1x128xf32, #tpu.memory_space<vmem>>, vector<1x128xf32>
      %45 = vector.broadcast %44 : vector<1x128xf32> to vector<2x128xf32>
      %46 = arith.addf %43, %45 : vector<2x128xf32>
      %c0_36 = arith.constant 0 : index
      %c0_37 = arith.constant 0 : index
      %47 = vector.load %arg4[%c0_36, %c0_37] : memref<128x128xf32, #tpu.memory_space<vmem>>, vector<128x128xf32>
      %cst_38 = arith.constant dense<0.000000e+00> : vector<2x128xf32>
      %48 = tpu.matmul %46, %47, %cst_38 {dimension_numbers = #tpu.dot_dimension_numbers<[1], [0], [0], [1], [0, 0, 1, 1], [], []>, precision = #tpu.contract_precision<fp32>} : vector<2x128xf32>, vector<128x128xf32>, vector<2x128xf32> -> vector<2x128xf32>
      %c0_39 = arith.constant 0 : index
      %c0_40 = arith.constant 0 : index
      %49 = vector.load %arg5[%c0_39, %c0_40] : memref<1x128xf32, #tpu.memory_space<vmem>>, vector<1x128xf32>
      %50 = vector.broadcast %49 : vector<1x128xf32> to vector<2x128xf32>
      %51 = arith.addf %48, %50 : vector<2x128xf32>
      %cst_41 = arith.constant dense<0.000000e+00> : vector<128xf32>
      %52 = vector.multi_reduction <add>, %51, %cst_41 [0] : vector<2x128xf32> to vector<128xf32>
      %53 = vector.shape_cast %52 : vector<128xf32> to vector<1x128xf32>
      %cst_42 = arith.constant 2.000000e+00 : f32
      %54 = vector.broadcast %cst_42 : f32 to vector<1x128xf32>
      %55 = arith.divf %53, %54 : vector<1x128xf32>
      %56 = vector.broadcast %55 : vector<1x128xf32> to vector<2x128xf32>
      %57 = arith.subf %51, %56 : vector<2x128xf32>
      %58 = vector.broadcast %55 : vector<1x128xf32> to vector<2x128xf32>
      %59 = arith.subf %51, %58 : vector<2x128xf32>
      %60 = arith.mulf %57, %59 : vector<2x128xf32>
      %cst_43 = arith.constant dense<0.000000e+00> : vector<128xf32>
      %61 = vector.multi_reduction <add>, %60, %cst_43 [0] : vector<2x128xf32> to vector<128xf32>
      %62 = vector.shape_cast %61 : vector<128xf32> to vector<1x128xf32>
      %cst_44 = arith.constant 2.000000e+00 : f32
      %63 = vector.broadcast %cst_44 : f32 to vector<1x128xf32>
      %64 = arith.divf %62, %63 : vector<1x128xf32>
      %65 = vector.broadcast %55 : vector<1x128xf32> to vector<2x128xf32>
      %66 = arith.subf %51, %65 : vector<2x128xf32>
      %cst_45 = arith.constant 9.99999974E-6 : f32
      %67 = vector.broadcast %cst_45 : f32 to vector<1x128xf32>
      %68 = arith.addf %64, %67 : vector<1x128xf32>
      %69 = math.rsqrt %68 : vector<1x128xf32>
      %70 = vector.broadcast %69 : vector<1x128xf32> to vector<2x128xf32>
      %71 = arith.mulf %66, %70 : vector<2x128xf32>
      %c0_46 = arith.constant 0 : index
      %c0_47 = arith.constant 0 : index
      %72 = vector.load %arg6[%c0_46, %c0_47] : memref<1x128xf32, #tpu.memory_space<vmem>>, vector<1x128xf32>
      %73 = vector.broadcast %72 : vector<1x128xf32> to vector<2x128xf32>
      %74 = arith.mulf %71, %73 : vector<2x128xf32>
      %c0_48 = arith.constant 0 : index
      %c0_49 = arith.constant 0 : index
      %75 = vector.load %arg7[%c0_48, %c0_49] : memref<1x128xf32, #tpu.memory_space<vmem>>, vector<1x128xf32>
      %76 = vector.broadcast %75 : vector<1x128xf32> to vector<2x128xf32>
      %77 = arith.addf %74, %76 : vector<2x128xf32>
      %cst_50 = arith.constant 0.000000e+00 : f32
      %78 = vector.broadcast %cst_50 : f32 to vector<2x128xf32>
      %79 = arith.maximumf %77, %78 : vector<2x128xf32>
      %c0_51 = arith.constant 0 : index
      %c0_52 = arith.constant 0 : index
      %80 = vector.load %arg8[%c0_51, %c0_52] : memref<128x2xf32, #tpu.memory_space<vmem>>, vector<128x2xf32>
      %cst_53 = arith.constant dense<0.000000e+00> : vector<2x2xf32>
      %81 = tpu.matmul %79, %80, %cst_53 {dimension_numbers = #tpu.dot_dimension_numbers<[1], [0], [0], [1], [0, 0, 1, 1], [], []>, precision = #tpu.contract_precision<fp32>} : vector<2x128xf32>, vector<128x2xf32>, vector<2x2xf32> -> vector<2x2xf32>
      %c0_54 = arith.constant 0 : index
      %c0_55 = arith.constant 0 : index
      %82 = vector.load %arg9[%c0_54, %c0_55] : memref<1x2xf32, #tpu.memory_space<vmem>>, vector<1x2xf32>
      %83 = vector.broadcast %82 : vector<1x2xf32> to vector<2x2xf32>
      %84 = arith.addf %81, %83 : vector<2x2xf32>
      %cst_56 = arith.constant dense<0xFF800000> : vector<2xf32>
      %85 = vector.multi_reduction <maximumf>, %84, %cst_56 [1] : vector<2x2xf32> to vector<2xf32>
      %86 = vector.shape_cast %85 : vector<2xf32> to vector<2x1xf32>
      %87 = vector.broadcast %86 : vector<2x1xf32> to vector<2x2xf32>
      %88 = arith.subf %84, %87 : vector<2x2xf32>
      %89 = math.exp %88 : vector<2x2xf32>
      %cst_57 = arith.constant dense<0.000000e+00> : vector<2xf32>
      %90 = vector.multi_reduction <add>, %89, %cst_57 [1] : vector<2x2xf32> to vector<2xf32>
      %91 = vector.shape_cast %90 : vector<2xf32> to vector<2x1xf32>
      %92 = math.log %91 : vector<2x1xf32>
      %93 = arith.addf %92, %86 : vector<2x1xf32>
      %94 = vector.broadcast %93 : vector<2x1xf32> to vector<2x2xf32>
      %95 = arith.subf %84, %94 : vector<2x2xf32>
      %c0_58 = arith.constant 0 : index
      %c0_59 = arith.constant 0 : index
      %96 = vector.load %arg10[%c0_58, %c0_59] : memref<2x2xf32, #tpu.memory_space<vmem>>, vector<2x2xf32>
      tpu.vector_store %arg10[%c0_58, %c0_59], %95 {strides = array<i32>} : memref<2x2xf32, #tpu.memory_space<vmem>>, vector<2x2xf32>,
    } else {
    }
    return
  }
  func.func @transform_0(%arg0: i32) -> (i32, i32, i32, i32) {
    %c0_i32 = arith.constant 0 : i32
    %c0_i32_0 = arith.constant 0 : i32
    %c0_i32_1 = arith.constant 0 : i32
    %c0_i32_2 = arith.constant 0 : i32
    return %c0_i32, %c0_i32_0, %arg0, %c0_i32_1 : i32, i32, i32, i32
  }
  func.func @transform_1(%arg0: i32) -> (i32, i32) {
    %c0_i32 = arith.constant 0 : i32
    %c0_i32_0 = arith.constant 0 : i32
    %c0_i32_1 = arith.constant 0 : i32
    return %c0_i32, %c0_i32_0 : i32, i32
  }
  func.func @transform_2(%arg0: i32) -> (i32, i32) {
    %c0_i32 = arith.constant 0 : i32
    %c0_i32_0 = arith.constant 0 : i32
    %c0_i32_1 = arith.constant 0 : i32
    return %c0_i32, %c0_i32_0 : i32, i32
  }
  func.func @transform_3(%arg0: i32) -> (i32, i32) {
    %c0_i32 = arith.constant 0 : i32
    %c0_i32_0 = arith.constant 0 : i32
    %c0_i32_1 = arith.constant 0 : i32
    return %c0_i32, %c0_i32_0 : i32, i32
  }
  func.func @transform_4(%arg0: i32) -> (i32, i32) {
    %c0_i32 = arith.constant 0 : i32
    %c0_i32_0 = arith.constant 0 : i32
    %c0_i32_1 = arith.constant 0 : i32
    return %c0_i32, %c0_i32_0 : i32, i32
  }
  func.func @transform_5(%arg0: i32) -> (i32, i32) {
    %c0_i32 = arith.constant 0 : i32
    %c0_i32_0 = arith.constant 0 : i32
    %c0_i32_1 = arith.constant 0 : i32
    return %c0_i32, %c0_i32_0 : i32, i32
  }
  func.func @transform_6(%arg0: i32) -> (i32, i32) {
    %c0_i32 = arith.constant 0 : i32
    %c0_i32_0 = arith.constant 0 : i32
    %c0_i32_1 = arith.constant 0 : i32
    return %c0_i32, %c0_i32_0 : i32, i32
  }
  func.func @transform_7(%arg0: i32) -> (i32, i32) {
    %c0_i32 = arith.constant 0 : i32
    %c0_i32_0 = arith.constant 0 : i32
    %c0_i32_1 = arith.constant 0 : i32
    return %c0_i32, %c0_i32_0 : i32, i32
  }
  func.func @transform_8(%arg0: i32) -> (i32, i32) {
    %c0_i32 = arith.constant 0 : i32
    %c0_i32_0 = arith.constant 0 : i32
    %c0_i32_1 = arith.constant 0 : i32
    return %c0_i32, %c0_i32_0 : i32, i32
  }
  func.func @transform_9(%arg0: i32) -> (i32, i32) {
    %c0_i32 = arith.constant 0 : i32
    %c0_i32_0 = arith.constant 0 : i32
    %c0_i32_1 = arith.constant 0 : i32
    return %c0_i32, %c0_i32_0 : i32, i32
  }
}

</mosaic_0001>

<llo_original>
// kernel: dsc_classifier_forward.1
$region0: #{dsc_classifier_forward.1}
  #allocation0 [shape = 'u32[]', space=smem, size = 0x4, offset = 0x4, fixed_abs, tag = 'smem constant byte address 0x4 - core index']
  #allocation1 [shape = 'u32[144,128]{1,0:T(1,128)}', space=vmem, size = 0x12000, scoped, tag = 'internal scratch']
  #allocation2 [shape = 'f32[2,36]{1,0:T(2,128)}', space=vmem, size = 0x400, scoped, tag = 'scratch operand']
  %s0 = inlined_call_operand.vmem [shape: f32[2,4,16,16], index: 0, kind: input, shape index: {}]
  %s1 = inlined_call_operand.vmem [shape: f32[36,128], index: 1, kind: input, shape index: {}]
  %s2 = inlined_call_operand.vmem [shape: f32[1,128], index: 2, kind: input, shape index: {}]
  %s3 = inlined_call_operand.vmem [shape: f32[128,128], index: 3, kind: input, shape index: {}]
  %s4 = inlined_call_operand.vmem [shape: f32[1,128], index: 4, kind: input, shape index: {}]
  %s5 = inlined_call_operand.vmem [shape: f32[1,128], index: 5, kind: input, shape index: {}]
  %s6 = inlined_call_operand.vmem [shape: f32[1,128], index: 6, kind: input, shape index: {}]
  %s7 = inlined_call_operand.vmem [shape: f32[128,2], index: 7, kind: input, shape index: {}]
  %s8 = inlined_call_operand.vmem [shape: f32[1,2], index: 8, kind: input, shape index: {}]
  %s9 = inlined_call_operand.hbm [shape: f32[2,2], index: 9, kind: output, shape index: {}]
  %s10 = sld [smem:[#allocation0]]
  $region54: #{dsc_classifier_forward.1} parent=0
    _
  %s12 = ssub.s32 1, %s10
  %s13 = scalar_select 0, %s12, %s10
  $region1: #{dsc_classifier_forward.1} parent=0
    #allocation3 [shape = 'u8[1024]{0}', space=vmem, size = 0x400, scoped, tag = 'output window, operand 0, single buffered']
    #allocation4 [shape = 's32[1]{0}', space=sflag, size = 0x4, scoped, tag = 'scoped memory for dsc_classifier_forward.1']
    %14 = vsyncpa [#allocation4], 0
    // Predicated region
    $region2: #{dsc_classifier_forward.1} parent=1 // pred_check
      _
    $region3: #{dsc_classifier_forward.1} parent=1 // pred_check_branch
      %16 = sbr.rel (0) target = $region5
    $region4: #{dsc_classifier_forward.1} parent=1 // pred_region
      _
    $region5: #{dsc_classifier_forward.1} parent=1 // pred_fallthru
      _
    // Predicated region
    $region6: #{dsc_classifier_forward.1} parent=1 // pred_check
      _
    $region7: #{dsc_classifier_forward.1} parent=1 // pred_check_branch
      %18 = sbr.rel (0) target = $region9
    $region8: #{dsc_classifier_forward.1} parent=1 // pred_region
      _
    $region9: #{dsc_classifier_forward.1} parent=1 // pred_fallthru
      _
    // Predicated region
    $region10: #{dsc_classifier_forward.1} parent=1 // pred_check
      _
    $region11: #{dsc_classifier_forward.1} parent=1 // pred_check_branch
      %20 = sbr.rel (0) target = $region13
    $region12: #{dsc_classifier_forward.1} parent=1 // pred_region
      _
    $region13: #{dsc_classifier_forward.1} parent=1 // pred_fallthru
      _
    // Predicated region
    $region14: #{dsc_classifier_forward.1} parent=1 // pred_check
      _
    $region15: #{dsc_classifier_forward.1} parent=1 // pred_check_branch
      %22 = sbr.rel (0) target = $region17
    $region16: #{dsc_classifier_forward.1} parent=1 // pred_region
      _
    $region17: #{dsc_classifier_forward.1} parent=1 // pred_fallthru
      _
    // Predicated region
    $region18: #{dsc_classifier_forward.1} parent=1 // pred_check
      _
    $region19: #{dsc_classifier_forward.1} parent=1 // pred_check_branch
      %24 = sbr.rel (0) target = $region21
    $region20: #{dsc_classifier_forward.1} parent=1 // pred_region
      _
    $region21: #{dsc_classifier_forward.1} parent=1 // pred_fallthru
      _
    // Predicated region
    $region22: #{dsc_classifier_forward.1} parent=1 // pred_check
      _
    $region23: #{dsc_classifier_forward.1} parent=1 // pred_check_branch
      %26 = sbr.rel (0) target = $region25
    $region24: #{dsc_classifier_forward.1} parent=1 // pred_region
      _
    $region25: #{dsc_classifier_forward.1} parent=1 // pred_fallthru
      _
    // Predicated region
    $region26: #{dsc_classifier_forward.1} parent=1 // pred_check
      _
    $region27: #{dsc_classifier_forward.1} parent=1 // pred_check_branch
      %28 = sbr.rel (0) target = $region29
    $region28: #{dsc_classifier_forward.1} parent=1 // pred_region
      _
    $region29: #{dsc_classifier_forward.1} parent=1 // pred_fallthru
      _
    // Predicated region
    $region30: #{dsc_classifier_forward.1} parent=1 // pred_check
      _
    $region31: #{dsc_classifier_forward.1} parent=1 // pred_check_branch
      %30 = sbr.rel (0) target = $region33
    $region32: #{dsc_classifier_forward.1} parent=1 // pred_region
      _
    $region33: #{dsc_classifier_forward.1} parent=1 // pred_fallthru
      _
    // Predicated region
    $region34: #{dsc_classifier_forward.1} parent=1 // pred_check
      _
    $region35: #{dsc_classifier_forward.1} parent=1 // pred_check_branch
      %32 = sbr.rel (0) target = $region37
    $region36: #{dsc_classifier_forward.1} parent=1 // pred_region
      _
    $region37: #{dsc_classifier_forward.1} parent=1 // pred_fallthru
      _
    %p33 = scmp.eq.s32.totalorder 0, 0
    // Predicated region
    $region38: #{dsc_classifier_forward.1} parent=1 // pred_check
      %p34 = pneg %p33
    $region39: #{dsc_classifier_forward.1} parent=1 // pred_check_branch
      %36 = sbr.rel (%p34) target = $region41
    $region40: #{dsc_classifier_forward.1} parent=1 // pred_region
      %vm37 = vcmask 287744
      %38 = vst.msk [vmem:[#allocation2] sm:$0x3] %vm37, 0.0
    $region41: #{dsc_classifier_forward.1} parent=1 // pred_fallthru
      _
    %v39 = vld [vmem:[%s0] sm:$0xff]
    %v40 = vld [vmem:[%s0 + $0x8] sm:$0xff]
    %v41 = vld [vmem:[%s0 + $0x10] sm:$0xff]
    %v42 = vld [vmem:[%s0 + $0x18] sm:$0xff]
    %v43 = vld [vmem:[%s0 + $0x20] sm:$0xff]
    %v44 = vld [vmem:[%s0 + $0x28] sm:$0xff]
    %v45 = vld [vmem:[%s0 + $0x30] sm:$0xff]
    %v46 = vld [vmem:[%s0 + $0x38] sm:$0xff]
    %v47 = vld [vmem:[%s0 + $0x40] sm:$0xff]
    %v48 = vld [vmem:[%s0 + $0x48] sm:$0xff]
    %v49 = vld [vmem:[%s0 + $0x50] sm:$0xff]
    %v50 = vld [vmem:[%s0 + $0x58] sm:$0xff]
    %v51 = vld [vmem:[%s0 + $0x60] sm:$0xff]
    %v52 = vld [vmem:[%s0 + $0x68] sm:$0xff]
    %v53 = vld [vmem:[%s0 + $0x70] sm:$0xff]
    %v54 = vld [vmem:[%s0 + $0x78] sm:$0xff]
    %vm55 = vcmask 130048
    %v56 = vsel %vm55, %v39, 0.0
    %v57 = vsel %vm55, %v40, 0.0
    %v58 = vadd.f32 %v56, %v57
    %v59 = vrot.slane %v58, 4
    %v60 = vadd.f32 %v58, %v59
    %v61 = vrot.slane %v60, 2
    %v62 = vadd.f32 %v60, %v61
    %v63 = vrot.slane %v62, 1
    %v64 = vadd.f32 %v62, %v63
    %v65 = vsel %vm55, %v41, 0.0
    %v66 = vsel %vm55, %v42, 0.0
    %v67 = vadd.f32 %v65, %v66
    %v68 = vrot.slane %v67, 4
    %v69 = vadd.f32 %v67, %v68
    %v70 = vrot.slane %v69, 2
    %v71 = vadd.f32 %v69, %v70
    %v72 = vrot.slane %v71, 1
    %v73 = vadd.f32 %v71, %v72
    %v74 = vsel %vm55, %v43, 0.0
    %v75 = vsel %vm55, %v44, 0.0
    %v76 = vadd.f32 %v74, %v75
    %v77 = vrot.slane %v76, 4
    %v78 = vadd.f32 %v76, %v77
    %v79 = vrot.slane %v78, 2
    %v80 = vadd.f32 %v78, %v79
    %v81 = vrot.slane %v80, 1
    %v82 = vadd.f32 %v80, %v81
    %v83 = vsel %vm55, %v45, 0.0
    %v84 = vsel %vm55, %v46, 0.0
    %v85 = vadd.f32 %v83, %v84
    %v86 = vrot.slane %v85, 4
    %v87 = vadd.f32 %v85, %v86
    %v88 = vrot.slane %v87, 2
    %v89 = vadd.f32 %v87, %v88
    %v90 = vrot.slane %v89, 1
    %v91 = vadd.f32 %v89, %v90
    %v92 = vsel %vm55, %v47, 0.0
    %v93 = vsel %vm55, %v48, 0.0
    %v94 = vadd.f32 %v92, %v93
    %v95 = vrot.slane %v94, 4
    %v96 = vadd.f32 %v94, %v95
    %v97 = vrot.slane %v96, 2
    %v98 = vadd.f32 %v96, %v97
    %v99 = vrot.slane %v98, 1
    %v100 = vadd.f32 %v98, %v99
    %v101 = vsel %vm55, %v49, 0.0
    %v102 = vsel %vm55, %v50, 0.0
    %v103 = vadd.f32 %v101, %v102
    %v104 = vrot.slane %v103, 4
    %v105 = vadd.f32 %v103, %v104
    %v106 = vrot.slane %v105, 2
    %v107 = vadd.f32 %v105, %v106
    %v108 = vrot.slane %v107, 1
    %v109 = vadd.f32 %v107, %v108
    %v110 = vsel %vm55, %v51, 0.0
    %v111 = vsel %vm55, %v52, 0.0
    %v112 = vadd.f32 %v110, %v111
    %v113 = vrot.slane %v112, 4
    %v114 = vadd.f32 %v112, %v113
    %v115 = vrot.slane %v114, 2
    %v116 = vadd.f32 %v114, %v115
    %v117 = vrot.slane %v116, 1
    %v118 = vadd.f32 %v116, %v117
    %v119 = vsel %vm55, %v53, 0.0
    %v120 = vsel %vm55, %v54, 0.0
    %v121 = vadd.f32 %v119, %v120
    %v122 = vrot.slane %v121, 4
    %v123 = vadd.f32 %v121, %v122
    %v124 = vrot.slane %v123, 2
    %v125 = vadd.f32 %v123, %v124
    %v126 = vrot.slane %v125, 1
    %v127 = vadd.f32 %v125, %v126
    %v128 = vld [vmem:[#allocation2] sm:$0x3]
    %vm137 = vcmask 1041409
    %v138 = vsel %vm137, %v73, %v64
    %vm139 = vcmask 1042434
    %v140 = vsel %vm139, %v82, %v138
    %vm141 = vcmask 1043459
    %v142 = vsel %vm141, %v91, %v140
    %v143 = vsel %vm137, %v109, %v100
    %v144 = vsel %vm139, %v118, %v143
    %v145 = vsel %vm141, %v127, %v144
    %vm148 = vcmask 125952
    %v149 = vsel %vm148, %v142, 0.0
    %150 = vadd.xlane.f32.xlu0 %v149
    %v151 = vpop.xlane.xlu0 %150
    %v152 = vsel %vm148, %v145, 0.0
    %153 = vadd.xlane.f32.xlu0 %v152
    %v154 = vpop.xlane.xlu0 %153
    %v157 = vlaneseq
    %v158 = vand.u32 %v157, 127
    %v159 = vlaneseq
    %v160 = vshrl.u32 %v159, 7
    %v161 = vsub.s32 %v158, %v160
    %v162 = vrot.slane %v151, %v161
    %v163 = vlaneseq
    %v164 = vshrl.u32 %v163, 7
    %v165 = vsub.s32 %v158, %v164
    %v166 = vrot.slane %v154, %v165
    %v167 = vsel %vm137, %v166, %v162
    %v169 = vadd.f32 %v128, %v167
    %vm170 = vcmask 25600
    %171 = vst.msk [vmem:[#allocation2] sm:$0x3] %vm170, %v169
    %v172 = vld [vmem:[#allocation2] sm:$0x3]
    %173 = vset.pattern.permute.xlu0 0
    %174 = vperm.xlu0 %173, %v142
    %v175 = vpop.permute.xlu0 %174
    %176 = vset.pattern.permute.xlu0 0
    %177 = vperm.xlu0 %176, %v145
    %v178 = vpop.permute.xlu0 %177
    %v179 = vadd.s32 %v158, 4294967284
    %v180 = vlaneseq
    %v181 = vshrl.u32 %v180, 7
    %v182 = vsub.s32 %v179, %v181
    %v183 = vrot.slane %v175, %v182
    %v184 = vlaneseq
    %v185 = vshrl.u32 %v184, 7
    %v186 = vsub.s32 %v179, %v185
    %v187 = vrot.slane %v178, %v186
    %v188 = vsel %vm137, %v187, %v183
    %v190 = vadd.f32 %v172, %v188
    %vm191 = vcmask 124000
    %192 = vst.msk [vmem:[#allocation2] sm:$0x3] %vm191, %v190
    %v193 = vld [vmem:[#allocation2] sm:$0x3]
    %194 = vset.pattern.permute.xlu0 15
    %195 = vperm.xlu0 %194, %v142
    %v196 = vpop.permute.xlu0 %195
    %197 = vset.pattern.permute.xlu0 15
    %198 = vperm.xlu0 %197, %v145
    %v199 = vpop.permute.xlu0 %198
    %v200 = vadd.s32 %v158, 4294967280
    %v201 = vlaneseq
    %v202 = vshrl.u32 %v201, 7
    %v203 = vsub.s32 %v200, %v202
    %v204 = vrot.slane %v196, %v203
    %v205 = vlaneseq
    %v206 = vshrl.u32 %v205, 7
    %v207 = vsub.s32 %v200, %v206
    %v208 = vrot.slane %v199, %v207
    %v209 = vsel %vm137, %v208, %v204
    %v211 = vadd.f32 %v193, %v209
    %vm212 = vcmask 156800
    %213 = vst.msk [vmem:[#allocation2] sm:$0x3] %vm212, %v211
    // Predicated region
    $region42: #{dsc_classifier_forward.1} parent=1 // pred_check
      %p214 = pneg %p33
    $region43: #{dsc_classifier_forward.1} parent=1 // pred_check_branch
      %216 = sbr.rel (%p214) target = $region45
    $region44: #{dsc_classifier_forward.1} parent=1 // pred_region
      %v217 = vld [vmem:[#allocation2] sm:$0x3]
      %v226 = vrot.slane %v41, 7
      %v227 = vsel %vm137, %v226, %v39
      %v228 = vrot.slane %v43, 6
      %v229 = vsel %vm139, %v228, %v227
      %v230 = vrot.slane %v45, 5
      %v231 = vsel %vm141, %v230, %v229
      %v232 = vrot.slane %v49, 7
      %v233 = vsel %vm137, %v232, %v47
      %v234 = vrot.slane %v51, 6
      %v235 = vsel %vm139, %v234, %v233
      %v236 = vrot.slane %v53, 5
      %v237 = vsel %vm141, %v236, %v235
      %v240 = vsel %vm148, %v231, 0.0
      %241 = vadd.xlane.f32.xlu0 %v240
      %v242 = vpop.xlane.xlu0 %241
      %v243 = vsel %vm148, %v237, 0.0
      %244 = vadd.xlane.f32.xlu0 %v243
      %v245 = vpop.xlane.xlu0 %244
      %v248 = vadd.s32 %v158, 4294967292
      %v249 = vlaneseq
      %v250 = vshrl.u32 %v249, 7
      %v251 = vsub.s32 %v248, %v250
      %v252 = vrot.slane %v242, %v251
      %v253 = vlaneseq
      %v254 = vshrl.u32 %v253, 7
      %v255 = vsub.s32 %v248, %v254
      %v256 = vrot.slane %v245, %v255
      %v257 = vsel %vm137, %v256, %v252
      %v259 = vadd.f32 %v217, %v257
      %vm260 = vcmask 58400
      %261 = vst.msk [vmem:[#allocation2] sm:$0x3] %vm260, %v259
      %v262 = vld [vmem:[#allocation2] sm:$0x3]
      %263 = vset.pattern.permute.xlu0 0
      %264 = vperm.xlu0 %263, %v231
      %v265 = vpop.permute.xlu0 %264
      %266 = vset.pattern.permute.xlu0 0
      %267 = vperm.xlu0 %266, %v237
      %v268 = vpop.permute.xlu0 %267
      %v269 = vadd.s32 %v158, 4294967276
      %v270 = vlaneseq
      %v271 = vshrl.u32 %v270, 7
      %v272 = vsub.s32 %v269, %v271
      %v273 = vrot.slane %v265, %v272
      %v274 = vlaneseq
      %v275 = vshrl.u32 %v274, 7
      %v276 = vsub.s32 %v269, %v275
      %v277 = vrot.slane %v268, %v276
      %v278 = vsel %vm137, %v277, %v273
      %v280 = vadd.f32 %v262, %v278
      %vm281 = vcmask 189600
      %282 = vst.msk [vmem:[#allocation2] sm:$0x3] %vm281, %v280
      %v283 = vld [vmem:[#allocation2] sm:$0x3]
      %284 = vset.pattern.permute.xlu0 15
      %285 = vperm.xlu0 %284, %v231
      %v286 = vpop.permute.xlu0 %285
      %287 = vset.pattern.permute.xlu0 15
      %288 = vperm.xlu0 %287, %v237
      %v289 = vpop.permute.xlu0 %288
      %v290 = vadd.s32 %v158, 4294967272
      %v291 = vlaneseq
      %v292 = vshrl.u32 %v291, 7
      %v293 = vsub.s32 %v290, %v292
      %v294 = vrot.slane %v286, %v293
      %v295 = vlaneseq
      %v296 = vshrl.u32 %v295, 7
      %v297 = vsub.s32 %v290, %v296
      %v298 = vrot.slane %v289, %v297
      %v299 = vsel %vm137, %v298, %v294
      %v301 = vadd.f32 %v283, %v299
      %vm302 = vcmask 222400
      %303 = vst.msk [vmem:[#allocation2] sm:$0x3] %vm302, %v301
      %v304 = vld [vmem:[#allocation2] sm:$0x3]
      %v313 = vrot.slane %v42, 7
      %v314 = vrot.slane %v44, 6
      %v315 = vsel %vm137, %v314, %v313
      %v316 = vrot.slane %v46, 5
      %v317 = vsel %vm139, %v316, %v315
      %v318 = vrot.slane %v50, 7
      %v319 = vrot.slane %v52, 6
      %v320 = vsel %vm137, %v319, %v318
      %v321 = vrot.slane %v54, 5
      %v322 = vsel %vm139, %v321, %v320
      %vm327 = vcmask 130055
      %v328 = vsel %vm327, %v40, 0.0
      %329 = vadd.xlane.f32.xlu0 %v328
      %v330 = vpop.xlane.xlu0 %329
      %vm331 = vcmask 124928
      %v332 = vsel %vm331, %v317, 0.0
      %333 = vadd.xlane.f32.xlu0 %v332
      %v334 = vpop.xlane.xlu0 %333
      %v335 = vsel %vm327, %v48, 0.0
      %336 = vadd.xlane.f32.xlu0 %v335
      %v337 = vpop.xlane.xlu0 %336
      %v338 = vsel %vm331, %v322, 0.0
      %339 = vadd.xlane.f32.xlu0 %v338
      %v340 = vpop.xlane.xlu0 %339
      %v345 = vadd.s32 %v158, 4294967295
      %v346 = vlaneseq
      %v347 = vshrl.u32 %v346, 7
      %v348 = vsub.s32 %v345, %v347
      %v349 = vrot.slane %v330, %v348
      %v350 = vadd.s32 %v158, 4294967287
      %v351 = vlaneseq
      %v352 = vshrl.u32 %v351, 7
      %v353 = vsub.s32 %v350, %v352
      %v354 = vrot.slane %v334, %v353
      %vm355 = vcmask 138312
      %v356 = vsel %vm355, %v354, %v349
      %v357 = vlaneseq
      %v358 = vshrl.u32 %v357, 7
      %v359 = vsub.s32 %v345, %v358
      %v360 = vrot.slane %v337, %v359
      %v361 = vlaneseq
      %v362 = vshrl.u32 %v361, 7
      %v363 = vsub.s32 %v350, %v362
      %v364 = vrot.slane %v340, %v363
      %v365 = vsel %vm355, %v364, %v360
      %v366 = vsel %vm137, %v365, %v356
      %v368 = vadd.f32 %v304, %v366
      %vm369 = vcmask 91200
      %370 = vst.msk [vmem:[#allocation2] sm:$0x3] %vm369, %v368
      %v371 = vld [vmem:[#allocation2] sm:$0x3]
      %v372 = vrot.slane %v40, 7
      %v373 = vrot.slane %v42, 6
      %v374 = vsel %vm137, %v373, %v372
      %v375 = vrot.slane %v44, 5
      %v376 = vsel %vm139, %v375, %v374
      %v377 = vrot.slane %v46, 4
      %v378 = vsel %vm141, %v377, %v376
      %v379 = vrot.slane %v48, 7
      %v380 = vrot.slane %v50, 6
      %v381 = vsel %vm137, %v380, %v379
      %v382 = vrot.slane %v52, 5
      %v383 = vsel %vm139, %v382, %v381
      %v384 = vrot.slane %v54, 4
      %v385 = vsel %vm141, %v384, %v383
      %386 = vset.pattern.permute.xlu0 0
      %387 = vperm.xlu0 %386, %v378
      %v388 = vpop.permute.xlu0 %387
      %389 = vset.pattern.permute.xlu0 0
      %390 = vperm.xlu0 %389, %v385
      %v391 = vpop.permute.xlu0 %390
      %v392 = vadd.s32 %v158, 4294967268
      %v393 = vlaneseq
      %v394 = vshrl.u32 %v393, 7
      %v395 = vsub.s32 %v392, %v394
      %v396 = vrot.slane %v388, %v395
      %v397 = vlaneseq
      %v398 = vshrl.u32 %v397, 7
      %v399 = vsub.s32 %v392, %v398
      %v400 = vrot.slane %v391, %v399
      %v401 = vsel %vm137, %v400, %v396
      %v403 = vadd.f32 %v371, %v401
      %vm404 = vcmask 255200
      %405 = vst.msk [vmem:[#allocation2] sm:$0x3] %vm404, %v403
      %v406 = vld [vmem:[#allocation2] sm:$0x3]
      %407 = vset.pattern.permute.xlu0 15
      %408 = vperm.xlu0 %407, %v378
      %v409 = vpop.permute.xlu0 %408
      %410 = vset.pattern.permute.xlu0 15
      %411 = vperm.xlu0 %410, %v385
      %v412 = vpop.permute.xlu0 %411
      %v413 = vadd.s32 %v158, 4294967264
      %v414 = vlaneseq
      %v415 = vshrl.u32 %v414, 7
      %v416 = vsub.s32 %v413, %v415
      %v417 = vrot.slane %v409, %v416
      %v418 = vlaneseq
      %v419 = vshrl.u32 %v418, 7
      %v420 = vsub.s32 %v413, %v419
      %v421 = vrot.slane %v412, %v420
      %v422 = vsel %vm137, %v421, %v417
      %v424 = vadd.f32 %v406, %v422
      %vm425 = vcmask 288000
      %426 = vst.msk [vmem:[#allocation2] sm:$0x3] %vm425, %v424
      %v427 = vld [vmem:[#allocation2] sm:$0x3]
      %v428 = vld [vmem:[%s1] sm:$0xff]
      %v429 = vld [vmem:[%s1 + $0x8] sm:$0xff]
      %v430 = vld [vmem:[%s1 + $0x10] sm:$0xff]
      %v431 = vld [vmem:[%s1 + $0x18] sm:$0xff]
      %v432 = vld [vmem:[%s1 + $0x20] sm:$0xf]
      %v433 = vld [vmem:[%s2] sm:$0x1]
      %v435 = vlaneseq
      %v436 = vshrl.u32 %v435, 7
      %v437 = vsub.s32 0, %v436
      %v438 = vrot.slane %v433, %v437
      %vm440 = vcmask 293888
      %v442 = vsel %vm440, %v427, 0
      %vm444 = vcmask 1043456
      %v446 = vsel %vm444, %v432, 0
      %448 = vmatprep.subr.mxu0 0.0
      %v449 = vand.u32 %v428, 4294901760
      %450 = vmatpush1.msra.mxu0 %v449
      %451 = vmatprep.subr.mxu0 0.0
      %v452 = vand.u32 %v429, 4294901760
      %453 = vmatpush1.msra.mxu0 %v452
      %454 = vmatprep.subr.mxu0 0.0
      %v455 = vand.u32 %v430, 4294901760
      %456 = vmatpush1.msra.mxu0 %v455
      %457 = vmatprep.subr.mxu0 0.0
      %v458 = vand.u32 %v431, 4294901760
      %459 = vmatpush1.msra.mxu0 %v458
      %460 = vmatprep.subr.mxu0 0.0
      %v461 = vand.u32 %v446, 4294901760
      %462 = vmatpush1.msra.mxu0 %v461
      %463 = vmatprep.subr.mxu0 0.0
      %464 = vmatpush1.msra.mxu0 0.0
      %465 = vmatprep.subr.mxu0 0.0
      %466 = vmatpush1.msra.mxu0 0.0
      %467 = vmatprep.subr.mxu0 0.0
      %468 = vmatpush1.msra.mxu0 0.0
      %469 = vmatprep.subr.mxu0 0.0
      %470 = vmatpush1.msra.mxu0 0.0
      %471 = vmatprep.subr.mxu0 0.0
      %472 = vmatpush1.msra.mxu0 0.0
      %473 = vmatprep.subr.mxu0 0.0
      %474 = vmatpush1.msra.mxu0 0.0
      %475 = vmatprep.subr.mxu0 0.0
      %476 = vmatpush1.msra.mxu0 0.0
      %477 = vmatprep.subr.mxu0 0.0
      %478 = vmatpush1.msra.mxu0 0.0
      %479 = vmatprep.subr.mxu0 0.0
      %480 = vmatpush1.msra.mxu0 0.0
      %481 = vmatprep.subr.mxu0 0.0
      %482 = vmatpush1.msra.mxu0 0.0
      %483 = vmatprep.subr.mxu0 0.0
      %484 = vmatpush1.msra.mxu0 0.0
      %485 = vmatprep.subr.mxu0 0.0
      %486 = vmatpush1.msra.mxu0 0.0
      %487 = vmatprep.subr.mxu0 0.0
      %488 = vmatpush1.msra.mxu0 0.0
      %489 = vmatprep.subr.mxu0 0.0
      %490 = vmatpush1.msra.mxu0 0.0
      %491 = vmatprep.subr.mxu0 0.0
      %492 = vmatpush1.msra.mxu0 0.0
      %493 = vmatprep.subr.mxu0 0.0
      %494 = vmatpush1.msra.mxu0 0.0
      %495 = vmatprep.subr.mxu0 0.0
      %496 = vmatpush1.msra.mxu0 0.0
      %497 = vmatprep.subr.mxu0 0.0
      %498 = vmatpush1.msra.mxu0 0.0
      %499 = vmatprep.subr.mxu0 0.0
      %500 = vmatpush1.msra.mxu0 0.0
      %501 = vmatprep.subr.mxu0 0.0
      %502 = vmatpush1.msra.mxu0 0.0
      %503 = vmatprep.subr.mxu0 0.0
      %504 = vmatpush1.msra.mxu0 0.0
      %505 = vmatprep.subr.mxu0 0.0
      %506 = vmatpush1.msra.mxu0 0.0
      %507 = vmatprep.subr.mxu0 0.0
      %508 = vmatpush1.msra.mxu0 0.0
      %509 = vmatprep.subr.mxu0 0.0
      %510 = vmatpush1.msra.mxu0 0.0
      %511 = vmatprep.subr.mxu0 0.0
      %512 = vmatpush1.msra.mxu0 0.0
      %513 = vmatprep.subr.mxu0 0.0
      %514 = vmatpush1.msra.mxu0 0.0
      %515 = vmatprep.subr.mxu0 0.0
      %516 = vmatpush1.msra.mxu0 0.0
      %517 = vmatprep.mubr.f32.mxu0 0.0
      %v518 = vand.u32 %v442, 4294901760
      %v519 = vsub.f32 %v442, %v518
      %v520 = vand.u32 %v519, 4294901760
      %v521 = vsub.f32 %v519, %v520
      %v522 = vand.u32 %v521, 4294901760
      %523 = vmatmul.mubr.f32.gmra.mrb[0].mxu0 %v522
      %v524 = vpop.f32.mrb[0].mxu0
      %v525 = vadd.f32 %v438, %v524
      %v526 = vpop.f32.mrb[0].mxu0
      %527 = vdwg.mxu0
      %528 = vmatprep.subr.mxu0 0.0
      %v529 = vand.u32 %v428, 4294901760
      %v530 = vsub.f32 %v428, %v529
      %v531 = vand.u32 %v530, 4294901760
      %v532 = vsub.f32 %v530, %v531
      %v533 = vand.u32 %v532, 4294901760
      %534 = vmatpush1.msra.mxu0 %v533
      %535 = vmatprep.subr.mxu0 0.0
      %v536 = vand.u32 %v429, 4294901760
      %v537 = vsub.f32 %v429, %v536
      %v538 = vand.u32 %v537, 4294901760
      %v539 = vsub.f32 %v537, %v538
      %v540 = vand.u32 %v539, 4294901760
      %541 = vmatpush1.msra.mxu0 %v540
      %542 = vmatprep.subr.mxu0 0.0
      %v543 = vand.u32 %v430, 4294901760
      %v544 = vsub.f32 %v430, %v543
      %v545 = vand.u32 %v544, 4294901760
      %v546 = vsub.f32 %v544, %v545
      %v547 = vand.u32 %v546, 4294901760
      %548 = vmatpush1.msra.mxu0 %v547
      %549 = vmatprep.subr.mxu0 0.0
      %v550 = vand.u32 %v431, 4294901760
      %v551 = vsub.f32 %v431, %v550
      %v552 = vand.u32 %v551, 4294901760
      %v553 = vsub.f32 %v551, %v552
      %v554 = vand.u32 %v553, 4294901760
      %555 = vmatpush1.msra.mxu0 %v554
      %556 = vmatprep.subr.mxu0 0.0
      %v557 = vand.u32 %v446, 4294901760
      %v558 = vsub.f32 %v446, %v557
      %v559 = vand.u32 %v558, 4294901760
      %v560 = vsub.f32 %v558, %v559
      %v561 = vand.u32 %v560, 4294901760
      %562 = vmatpush1.msra.mxu0 %v561
      %563 = vmatprep.subr.mxu0 0.0
      %564 = vmatpush1.msra.mxu0 0.0
      %565 = vmatprep.subr.mxu0 0.0
      %566 = vmatpush1.msra.mxu0 0.0
      %567 = vmatprep.subr.mxu0 0.0
      %568 = vmatpush1.msra.mxu0 0.0
      %569 = vmatprep.subr.mxu0 0.0
      %570 = vmatpush1.msra.mxu0 0.0
      %571 = vmatprep.subr.mxu0 0.0
      %572 = vmatpush1.msra.mxu0 0.0
      %573 = vmatprep.subr.mxu0 0.0
      %574 = vmatpush1.msra.mxu0 0.0
      %575 = vmatprep.subr.mxu0 0.0
      %576 = vmatpush1.msra.mxu0 0.0
      %577 = vmatprep.subr.mxu0 0.0
      %578 = vmatpush1.msra.mxu0 0.0
      %579 = vmatprep.subr.mxu0 0.0
      %580 = vmatpush1.msra.mxu0 0.0
      %581 = vmatprep.subr.mxu0 0.0
      %582 = vmatpush1.msra.mxu0 0.0
      %583 = vmatprep.subr.mxu0 0.0
      %584 = vmatpush1.msra.mxu0 0.0
      %585 = vmatprep.subr.mxu0 0.0
      %586 = vmatpush1.msra.mxu0 0.0
      %587 = vmatprep.subr.mxu0 0.0
      %588 = vmatpush1.msra.mxu0 0.0
      %589 = vmatprep.subr.mxu0 0.0
      %590 = vmatpush1.msra.mxu0 0.0
      %591 = vmatprep.subr.mxu0 0.0
      %592 = vmatpush1.msra.mxu0 0.0
      %593 = vmatprep.subr.mxu0 0.0
      %594 = vmatpush1.msra.mxu0 0.0
      %595 = vmatprep.subr.mxu0 0.0
      %596 = vmatpush1.msra.mxu0 0.0
      %597 = vmatprep.subr.mxu0 0.0
      %598 = vmatpush1.msra.mxu0 0.0
      %599 = vmatprep.subr.mxu0 0.0
      %600 = vmatpush1.msra.mxu0 0.0
      %601 = vmatprep.subr.mxu0 0.0
      %602 = vmatpush1.msra.mxu0 0.0
      %603 = vmatprep.subr.mxu0 0.0
      %604 = vmatpush1.msra.mxu0 0.0
      %605 = vmatprep.subr.mxu0 0.0
      %606 = vmatpush1.msra.mxu0 0.0
      %607 = vmatprep.subr.mxu0 0.0
      %608 = vmatpush1.msra.mxu0 0.0
      %609 = vmatprep.subr.mxu0 0.0
      %610 = vmatpush1.msra.mxu0 0.0
      %611 = vmatprep.subr.mxu0 0.0
      %612 = vmatpush1.msra.mxu0 0.0
      %613 = vmatprep.subr.mxu0 0.0
      %614 = vmatpush1.msra.mxu0 0.0
      %615 = vmatprep.subr.mxu0 0.0
      %616 = vmatpush1.msra.mxu0 0.0
      %617 = vmatprep.mubr.f32.mxu0 0.0
      %v618 = vand.u32 %v442, 4294901760
      %619 = vmatmul.mubr.f32.gmra.mrb[0].mxu0 %v618
      %v620 = vpop.f32.mrb[0].mxu0
      %v621 = vadd.f32 %v525, %v620
      %v622 = vpop.f32.mrb[0].mxu0
      %623 = vdwg.mxu0
      %624 = vmatprep.subr.mxu0 0.0
      %v625 = vand.u32 %v428, 4294901760
      %v626 = vsub.f32 %v428, %v625
      %627 = vmatpush1.msra.mxu0 %v626
      %628 = vmatprep.subr.mxu0 0.0
      %v629 = vand.u32 %v429, 4294901760
      %v630 = vsub.f32 %v429, %v629
      %631 = vmatpush1.msra.mxu0 %v630
      %632 = vmatprep.subr.mxu0 0.0
      %v633 = vand.u32 %v430, 4294901760
      %v634 = vsub.f32 %v430, %v633
      %635 = vmatpush1.msra.mxu0 %v634
      %636 = vmatprep.subr.mxu0 0.0
      %v637 = vand.u32 %v431, 4294901760
      %v638 = vsub.f32 %v431, %v637
      %639 = vmatpush1.msra.mxu0 %v638
      %640 = vmatprep.subr.mxu0 0.0
      %v641 = vand.u32 %v446, 4294901760
      %v642 = vsub.f32 %v446, %v641
      %643 = vmatpush1.msra.mxu0 %v642
      %644 = vmatprep.subr.mxu0 0.0
      %645 = vmatpush1.msra.mxu0 0.0
      %646 = vmatprep.subr.mxu0 0.0
      %647 = vmatpush1.msra.mxu0 0.0
      %648 = vmatprep.subr.mxu0 0.0
      %649 = vmatpush1.msra.mxu0 0.0
      %650 = vmatprep.subr.mxu0 0.0
      %651 = vmatpush1.msra.mxu0 0.0
      %652 = vmatprep.subr.mxu0 0.0
      %653 = vmatpush1.msra.mxu0 0.0
      %654 = vmatprep.subr.mxu0 0.0
      %655 = vmatpush1.msra.mxu0 0.0
      %656 = vmatprep.subr.mxu0 0.0
      %657 = vmatpush1.msra.mxu0 0.0
      %658 = vmatprep.subr.mxu0 0.0
      %659 = vmatpush1.msra.mxu0 0.0
      %660 = vmatprep.subr.mxu0 0.0
      %661 = vmatpush1.msra.mxu0 0.0
      %662 = vmatprep.subr.mxu0 0.0
      %663 = vmatpush1.msra.mxu0 0.0
      %664 = vmatprep.subr.mxu0 0.0
      %665 = vmatpush1.msra.mxu0 0.0
      %666 = vmatprep.subr.mxu0 0.0
      %667 = vmatpush1.msra.mxu0 0.0
      %668 = vmatprep.subr.mxu0 0.0
      %669 = vmatpush1.msra.mxu0 0.0
      %670 = vmatprep.subr.mxu0 0.0
      %671 = vmatpush1.msra.mxu0 0.0
      %672 = vmatprep.subr.mxu0 0.0
      %673 = vmatpush1.msra.mxu0 0.0
      %674 = vmatprep.subr.mxu0 0.0
      %675 = vmatpush1.msra.mxu0 0.0
      %676 = vmatprep.subr.mxu0 0.0
      %677 = vmatpush1.msra.mxu0 0.0
      %678 = vmatprep.subr.mxu0 0.0
      %679 = vmatpush1.msra.mxu0 0.0
      %680 = vmatprep.subr.mxu0 0.0
      %681 = vmatpush1.msra.mxu0 0.0
      %682 = vmatprep.subr.mxu0 0.0
      %683 = vmatpush1.msra.mxu0 0.0
      %684 = vmatprep.subr.mxu0 0.0
      %685 = vmatpush1.msra.mxu0 0.0
      %686 = vmatprep.subr.mxu0 0.0
      %687 = vmatpush1.msra.mxu0 0.0
      %688 = vmatprep.subr.mxu0 0.0
      %689 = vmatpush1.msra.mxu0 0.0
      %690 = vmatprep.subr.mxu0 0.0
      %691 = vmatpush1.msra.mxu0 0.0
      %692 = vmatprep.subr.mxu0 0.0
      %693 = vmatpush1.msra.mxu0 0.0
      %694 = vmatprep.subr.mxu0 0.0
      %695 = vmatpush1.msra.mxu0 0.0
      %696 = vmatprep.subr.mxu0 0.0
      %697 = vmatpush1.msra.mxu0 0.0
      %698 = vmatprep.mubr.f32.mxu0 0.0
      %v699 = vand.u32 %v442, 4294901760
      %v700 = vsub.f32 %v442, %v699
      %701 = vmatmul.mubr.f32.gmra.mrb[0].mxu0 %v700
      %v702 = vpop.f32.mrb[0].mxu0
      %v703 = vadd.f32 %v621, %v702
      %v704 = vpop.f32.mrb[0].mxu0
      %705 = vdwg.mxu0
      %706 = vmatprep.subr.mxu0 0.0
      %v707 = vand.u32 %v428, 4294901760
      %708 = vmatpush1.msra.mxu0 %v707
      %709 = vmatprep.subr.mxu0 0.0
      %v710 = vand.u32 %v429, 4294901760
      %711 = vmatpush1.msra.mxu0 %v710
      %712 = vmatprep.subr.mxu0 0.0
      %v713 = vand.u32 %v430, 4294901760
      %714 = vmatpush1.msra.mxu0 %v713
      %715 = vmatprep.subr.mxu0 0.0
      %v716 = vand.u32 %v431, 4294901760
      %717 = vmatpush1.msra.mxu0 %v716
      %718 = vmatprep.subr.mxu0 0.0
      %v719 = vand.u32 %v446, 4294901760
      %720 = vmatpush1.msra.mxu0 %v719
      %721 = vmatprep.subr.mxu0 0.0
      %722 = vmatpush1.msra.mxu0 0.0
      %723 = vmatprep.subr.mxu0 0.0
      %724 = vmatpush1.msra.mxu0 0.0
      %725 = vmatprep.subr.mxu0 0.0
      %726 = vmatpush1.msra.mxu0 0.0
      %727 = vmatprep.subr.mxu0 0.0
      %728 = vmatpush1.msra.mxu0 0.0
      %729 = vmatprep.subr.mxu0 0.0
      %730 = vmatpush1.msra.mxu0 0.0
      %731 = vmatprep.subr.mxu0 0.0
      %732 = vmatpush1.msra.mxu0 0.0
      %733 = vmatprep.subr.mxu0 0.0
      %734 = vmatpush1.msra.mxu0 0.0
      %735 = vmatprep.subr.mxu0 0.0
      %736 = vmatpush1.msra.mxu0 0.0
      %737 = vmatprep.subr.mxu0 0.0
      %738 = vmatpush1.msra.mxu0 0.0
      %739 = vmatprep.subr.mxu0 0.0
      %740 = vmatpush1.msra.mxu0 0.0
      %741 = vmatprep.subr.mxu0 0.0
      %742 = vmatpush1.msra.mxu0 0.0
      %743 = vmatprep.subr.mxu0 0.0
      %744 = vmatpush1.msra.mxu0 0.0
      %745 = vmatprep.subr.mxu0 0.0
      %746 = vmatpush1.msra.mxu0 0.0
      %747 = vmatprep.subr.mxu0 0.0
      %748 = vmatpush1.msra.mxu0 0.0
      %749 = vmatprep.subr.mxu0 0.0
      %750 = vmatpush1.msra.mxu0 0.0
      %751 = vmatprep.subr.mxu0 0.0
      %752 = vmatpush1.msra.mxu0 0.0
      %753 = vmatprep.subr.mxu0 0.0
      %754 = vmatpush1.msra.mxu0 0.0
      %755 = vmatprep.subr.mxu0 0.0
      %756 = vmatpush1.msra.mxu0 0.0
      %757 = vmatprep.subr.mxu0 0.0
      %758 = vmatpush1.msra.mxu0 0.0
      %759 = vmatprep.subr.mxu0 0.0
      %760 = vmatpush1.msra.mxu0 0.0
      %761 = vmatprep.subr.mxu0 0.0
      %762 = vmatpush1.msra.mxu0 0.0
      %763 = vmatprep.subr.mxu0 0.0
      %764 = vmatpush1.msra.mxu0 0.0
      %765 = vmatprep.subr.mxu0 0.0
      %766 = vmatpush1.msra.mxu0 0.0
      %767 = vmatprep.subr.mxu0 0.0
      %768 = vmatpush1.msra.mxu0 0.0
      %769 = vmatprep.subr.mxu0 0.0
      %770 = vmatpush1.msra.mxu0 0.0
      %771 = vmatprep.subr.mxu0 0.0
      %772 = vmatpush1.msra.mxu0 0.0
      %773 = vmatprep.subr.mxu0 0.0
      %774 = vmatpush1.msra.mxu0 0.0
      %775 = vmatprep.mubr.f32.mxu0 0.0
      %v776 = vand.u32 %v442, 4294901760
      %v777 = vsub.f32 %v442, %v776
      %v778 = vand.u32 %v777, 4294901760
      %779 = vmatmul.mubr.f32.gmra.mrb[0].mxu0 %v778
      %v780 = vpop.f32.mrb[0].mxu0
      %v781 = vadd.f32 %v703, %v780
      %v782 = vpop.f32.mrb[0].mxu0
      %783 = vdwg.mxu0
      %784 = vmatprep.subr.mxu0 0.0
      %v785 = vand.u32 %v428, 4294901760
      %v786 = vsub.f32 %v428, %v785
      %v787 = vand.u32 %v786, 4294901760
      %788 = vmatpush1.msra.mxu0 %v787
      %789 = vmatprep.subr.mxu0 0.0
      %v790 = vand.u32 %v429, 4294901760
      %v791 = vsub.f32 %v429, %v790
      %v792 = vand.u32 %v791, 4294901760
      %793 = vmatpush1.msra.mxu0 %v792
      %794 = vmatprep.subr.mxu0 0.0
      %v795 = vand.u32 %v430, 4294901760
      %v796 = vsub.f32 %v430, %v795
      %v797 = vand.u32 %v796, 4294901760
      %798 = vmatpush1.msra.mxu0 %v797
      %799 = vmatprep.subr.mxu0 0.0
      %v800 = vand.u32 %v431, 4294901760
      %v801 = vsub.f32 %v431, %v800
      %v802 = vand.u32 %v801, 4294901760
      %803 = vmatpush1.msra.mxu0 %v802
      %804 = vmatprep.subr.mxu0 0.0
      %v805 = vand.u32 %v446, 4294901760
      %v806 = vsub.f32 %v446, %v805
      %v807 = vand.u32 %v806, 4294901760
      %808 = vmatpush1.msra.mxu0 %v807
      %809 = vmatprep.subr.mxu0 0.0
      %810 = vmatpush1.msra.mxu0 0.0
      %811 = vmatprep.subr.mxu0 0.0
      %812 = vmatpush1.msra.mxu0 0.0
      %813 = vmatprep.subr.mxu0 0.0
      %814 = vmatpush1.msra.mxu0 0.0
      %815 = vmatprep.subr.mxu0 0.0
      %816 = vmatpush1.msra.mxu0 0.0
      %817 = vmatprep.subr.mxu0 0.0
      %818 = vmatpush1.msra.mxu0 0.0
      %819 = vmatprep.subr.mxu0 0.0
      %820 = vmatpush1.msra.mxu0 0.0
      %821 = vmatprep.subr.mxu0 0.0
      %822 = vmatpush1.msra.mxu0 0.0
      %823 = vmatprep.subr.mxu0 0.0
      %824 = vmatpush1.msra.mxu0 0.0
      %825 = vmatprep.subr.mxu0 0.0
      %826 = vmatpush1.msra.mxu0 0.0
      %827 = vmatprep.subr.mxu0 0.0
      %828 = vmatpush1.msra.mxu0 0.0
      %829 = vmatprep.subr.mxu0 0.0
      %830 = vmatpush1.msra.mxu0 0.0
      %831 = vmatprep.subr.mxu0 0.0
      %832 = vmatpush1.msra.mxu0 0.0
      %833 = vmatprep.subr.mxu0 0.0
      %834 = vmatpush1.msra.mxu0 0.0
      %835 = vmatprep.subr.mxu0 0.0
      %836 = vmatpush1.msra.mxu0 0.0
      %837 = vmatprep.subr.mxu0 0.0
      %838 = vmatpush1.msra.mxu0 0.0
      %839 = vmatprep.subr.mxu0 0.0
      %840 = vmatpush1.msra.mxu0 0.0
      %841 = vmatprep.subr.mxu0 0.0
      %842 = vmatpush1.msra.mxu0 0.0
      %843 = vmatprep.subr.mxu0 0.0
      %844 = vmatpush1.msra.mxu0 0.0
      %845 = vmatprep.subr.mxu0 0.0
      %846 = vmatpush1.msra.mxu0 0.0
      %847 = vmatprep.subr.mxu0 0.0
      %848 = vmatpush1.msra.mxu0 0.0
      %849 = vmatprep.subr.mxu0 0.0
      %850 = vmatpush1.msra.mxu0 0.0
      %851 = vmatprep.subr.mxu0 0.0
      %852 = vmatpush1.msra.mxu0 0.0
      %853 = vmatprep.subr.mxu0 0.0
      %854 = vmatpush1.msra.mxu0 0.0
      %855 = vmatprep.subr.mxu0 0.0
      %856 = vmatpush1.msra.mxu0 0.0
      %857 = vmatprep.subr.mxu0 0.0
      %858 = vmatpush1.msra.mxu0 0.0
      %859 = vmatprep.subr.mxu0 0.0
      %860 = vmatpush1.msra.mxu0 0.0
      %861 = vmatprep.subr.mxu0 0.0
      %862 = vmatpush1.msra.mxu0 0.0
      %863 = vmatprep.mubr.f32.mxu0 0.0
      %v864 = vand.u32 %v442, 4294901760
      %865 = vmatmul.mubr.f32.gmra.mrb[0].mxu0 %v864
      %v866 = vpop.f32.mrb[0].mxu0
      %v867 = vadd.f32 %v781, %v866
      %v868 = vpop.f32.mrb[0].mxu0
      %869 = vdwg.mxu0
      %870 = vmatprep.subr.mxu0 0.0
      %v871 = vand.u32 %v428, 4294901760
      %872 = vmatpush1.msra.mxu0 %v871
      %873 = vmatprep.subr.mxu0 0.0
      %v874 = vand.u32 %v429, 4294901760
      %875 = vmatpush1.msra.mxu0 %v874
      %876 = vmatprep.subr.mxu0 0.0
      %v877 = vand.u32 %v430, 4294901760
      %878 = vmatpush1.msra.mxu0 %v877
      %879 = vmatprep.subr.mxu0 0.0
      %v880 = vand.u32 %v431, 4294901760
      %881 = vmatpush1.msra.mxu0 %v880
      %882 = vmatprep.subr.mxu0 0.0
      %v883 = vand.u32 %v446, 4294901760
      %884 = vmatpush1.msra.mxu0 %v883
      %885 = vmatprep.subr.mxu0 0.0
      %886 = vmatpush1.msra.mxu0 0.0
      %887 = vmatprep.subr.mxu0 0.0
      %888 = vmatpush1.msra.mxu0 0.0
      %889 = vmatprep.subr.mxu0 0.0
      %890 = vmatpush1.msra.mxu0 0.0
      %891 = vmatprep.subr.mxu0 0.0
      %892 = vmatpush1.msra.mxu0 0.0
      %893 = vmatprep.subr.mxu0 0.0
      %894 = vmatpush1.msra.mxu0 0.0
      %895 = vmatprep.subr.mxu0 0.0
      %896 = vmatpush1.msra.mxu0 0.0
      %897 = vmatprep.subr.mxu0 0.0
      %898 = vmatpush1.msra.mxu0 0.0
      %899 = vmatprep.subr.mxu0 0.0
      %900 = vmatpush1.msra.mxu0 0.0
      %901 = vmatprep.subr.mxu0 0.0
      %902 = vmatpush1.msra.mxu0 0.0
      %903 = vmatprep.subr.mxu0 0.0
      %904 = vmatpush1.msra.mxu0 0.0
      %905 = vmatprep.subr.mxu0 0.0
      %906 = vmatpush1.msra.mxu0 0.0
      %907 = vmatprep.subr.mxu0 0.0
      %908 = vmatpush1.msra.mxu0 0.0
      %909 = vmatprep.subr.mxu0 0.0
      %910 = vmatpush1.msra.mxu0 0.0
      %911 = vmatprep.subr.mxu0 0.0
      %912 = vmatpush1.msra.mxu0 0.0
      %913 = vmatprep.subr.mxu0 0.0
      %914 = vmatpush1.msra.mxu0 0.0
      %915 = vmatprep.subr.mxu0 0.0
      %916 = vmatpush1.msra.mxu0 0.0
      %917 = vmatprep.subr.mxu0 0.0
      %918 = vmatpush1.msra.mxu0 0.0
      %919 = vmatprep.subr.mxu0 0.0
      %920 = vmatpush1.msra.mxu0 0.0
      %921 = vmatprep.subr.mxu0 0.0
      %922 = vmatpush1.msra.mxu0 0.0
      %923 = vmatprep.subr.mxu0 0.0
      %924 = vmatpush1.msra.mxu0 0.0
      %925 = vmatprep.subr.mxu0 0.0
      %926 = vmatpush1.msra.mxu0 0.0
      %927 = vmatprep.subr.mxu0 0.0
      %928 = vmatpush1.msra.mxu0 0.0
      %929 = vmatprep.subr.mxu0 0.0
      %930 = vmatpush1.msra.mxu0 0.0
      %931 = vmatprep.subr.mxu0 0.0
      %932 = vmatpush1.msra.mxu0 0.0
      %933 = vmatprep.subr.mxu0 0.0
      %934 = vmatpush1.msra.mxu0 0.0
      %935 = vmatprep.subr.mxu0 0.0
      %936 = vmatpush1.msra.mxu0 0.0
      %937 = vmatprep.subr.mxu0 0.0
      %938 = vmatpush1.msra.mxu0 0.0
      %939 = vmatprep.mubr.f32.mxu0 0.0
      %v940 = vand.u32 %v442, 4294901760
      %941 = vmatmul.mubr.f32.gmra.mrb[0].mxu0 %v940
      %v942 = vpop.f32.mrb[0].mxu0
      %v943 = vadd.f32 %v867, %v942
      %v944 = vpop.f32.mrb[0].mxu0
      %945 = vdwg.mxu0
      %v946 = vld [vmem:[%s3] sm:$0xff]
      %v947 = vld [vmem:[%s3 + $0x8] sm:$0xff]
      %v948 = vld [vmem:[%s3 + $0x10] sm:$0xff]
      %v949 = vld [vmem:[%s3 + $0x18] sm:$0xff]
      %v950 = vld [vmem:[%s3 + $0x20] sm:$0xff]
      %v951 = vld [vmem:[%s3 + $0x28] sm:$0xff]
      %v952 = vld [vmem:[%s3 + $0x30] sm:$0xff]
      %v953 = vld [vmem:[%s3 + $0x38] sm:$0xff]
      %v954 = vld [vmem:[%s3 + $0x40] sm:$0xff]
      %v955 = vld [vmem:[%s3 + $0x48] sm:$0xff]
      %v956 = vld [vmem:[%s3 + $0x50] sm:$0xff]
      %v957 = vld [vmem:[%s3 + $0x58] sm:$0xff]
      %v958 = vld [vmem:[%s3 + $0x60] sm:$0xff]
      %v959 = vld [vmem:[%s3 + $0x68] sm:$0xff]
      %v960 = vld [vmem:[%s3 + $0x70] sm:$0xff]
      %v961 = vld [vmem:[%s3 + $0x78] sm:$0xff]
      %v962 = vld [vmem:[%s4] sm:$0x1]
      %v964 = vlaneseq
      %v965 = vshrl.u32 %v964, 7
      %v966 = vsub.s32 0, %v965
      %v967 = vrot.slane %v962, %v966
      %969 = vmatprep.subr.mxu0 0.0
      %v970 = vand.u32 %v946, 4294901760
      %971 = vmatpush1.msra.mxu0 %v970
      %972 = vmatprep.subr.mxu0 0.0
      %v973 = vand.u32 %v947, 4294901760
      %974 = vmatpush1.msra.mxu0 %v973
      %975 = vmatprep.subr.mxu0 0.0
      %v976 = vand.u32 %v948, 4294901760
      %977 = vmatpush1.msra.mxu0 %v976
      %978 = vmatprep.subr.mxu0 0.0
      %v979 = vand.u32 %v949, 4294901760
      %980 = vmatpush1.msra.mxu0 %v979
      %981 = vmatprep.subr.mxu0 0.0
      %v982 = vand.u32 %v950, 4294901760
      %983 = vmatpush1.msra.mxu0 %v982
      %984 = vmatprep.subr.mxu0 0.0
      %v985 = vand.u32 %v951, 4294901760
      %986 = vmatpush1.msra.mxu0 %v985
      %987 = vmatprep.subr.mxu0 0.0
      %v988 = vand.u32 %v952, 4294901760
      %989 = vmatpush1.msra.mxu0 %v988
      %990 = vmatprep.subr.mxu0 0.0
      %v991 = vand.u32 %v953, 4294901760
      %992 = vmatpush1.msra.mxu0 %v991
      %993 = vmatprep.subr.mxu0 0.0
      %v994 = vand.u32 %v954, 4294901760
      %995 = vmatpush1.msra.mxu0 %v994
      %996 = vmatprep.subr.mxu0 0.0
      %v997 = vand.u32 %v955, 4294901760
      %998 = vmatpush1.msra.mxu0 %v997
      %999 = vmatprep.subr.mxu0 0.0
      %v1000 = vand.u32 %v956, 4294901760
      %1001 = vmatpush1.msra.mxu0 %v1000
      %1002 = vmatprep.subr.mxu0 0.0
      %v1003 = vand.u32 %v957, 4294901760
      %1004 = vmatpush1.msra.mxu0 %v1003
      %1005 = vmatprep.subr.mxu0 0.0
      %v1006 = vand.u32 %v958, 4294901760
      %1007 = vmatpush1.msra.mxu0 %v1006
      %1008 = vmatprep.subr.mxu0 0.0
      %v1009 = vand.u32 %v959, 4294901760
      %1010 = vmatpush1.msra.mxu0 %v1009
      %1011 = vmatprep.subr.mxu0 0.0
      %v1012 = vand.u32 %v960, 4294901760
      %1013 = vmatpush1.msra.mxu0 %v1012
      %1014 = vmatprep.subr.mxu0 0.0
      %v1015 = vand.u32 %v961, 4294901760
      %1016 = vmatpush1.msra.mxu0 %v1015
      %1017 = vmatprep.subr.mxu0 0.0
      %1018 = vmatpush1.msra.mxu0 0.0
      %1019 = vmatprep.subr.mxu0 0.0
      %1020 = vmatpush1.msra.mxu0 0.0
      %1021 = vmatprep.subr.mxu0 0.0
      %1022 = vmatpush1.msra.mxu0 0.0
      %1023 = vmatprep.subr.mxu0 0.0
      %1024 = vmatpush1.msra.mxu0 0.0
      %1025 = vmatprep.subr.mxu0 0.0
      %1026 = vmatpush1.msra.mxu0 0.0
      %1027 = vmatprep.subr.mxu0 0.0
      %1028 = vmatpush1.msra.mxu0 0.0
      %1029 = vmatprep.subr.mxu0 0.0
      %1030 = vmatpush1.msra.mxu0 0.0
      %1031 = vmatprep.subr.mxu0 0.0
      %1032 = vmatpush1.msra.mxu0 0.0
      %1033 = vmatprep.subr.mxu0 0.0
      %1034 = vmatpush1.msra.mxu0 0.0
      %1035 = vmatprep.subr.mxu0 0.0
      %1036 = vmatpush1.msra.mxu0 0.0
      %1037 = vmatprep.subr.mxu0 0.0
      %1038 = vmatpush1.msra.mxu0 0.0
      %1039 = vmatprep.subr.mxu0 0.0
      %1040 = vmatpush1.msra.mxu0 0.0
      %1041 = vmatprep.subr.mxu0 0.0
      %1042 = vmatpush1.msra.mxu0 0.0
      %1043 = vmatprep.subr.mxu0 0.0
      %1044 = vmatpush1.msra.mxu0 0.0
      %1045 = vmatprep.subr.mxu0 0.0
      %1046 = vmatpush1.msra.mxu0 0.0
      %1047 = vmatprep.subr.mxu0 0.0
      %1048 = vmatpush1.msra.mxu0 0.0
      %1049 = vmatprep.mubr.f32.mxu0 0.0
      %v1050 = vand.u32 %v943, 4294901760
      %v1051 = vsub.f32 %v943, %v1050
      %v1052 = vand.u32 %v1051, 4294901760
      %v1053 = vsub.f32 %v1051, %v1052
      %v1054 = vand.u32 %v1053, 4294901760
      %1055 = vmatmul.mubr.f32.gmra.mrb[0].mxu0 %v1054
      %v1056 = vpop.f32.mrb[0].mxu0
      %v1057 = vadd.f32 %v967, %v1056
      %v1058 = vpop.f32.mrb[0].mxu0
      %1059 = vdwg.mxu0
      %1060 = vmatprep.subr.mxu0 0.0
      %v1061 = vand.u32 %v946, 4294901760
      %v1062 = vsub.f32 %v946, %v1061
      %v1063 = vand.u32 %v1062, 4294901760
      %v1064 = vsub.f32 %v1062, %v1063
      %v1065 = vand.u32 %v1064, 4294901760
      %1066 = vmatpush1.msra.mxu0 %v1065
      %1067 = vmatprep.subr.mxu0 0.0
      %v1068 = vand.u32 %v947, 4294901760
      %v1069 = vsub.f32 %v947, %v1068
      %v1070 = vand.u32 %v1069, 4294901760
      %v1071 = vsub.f32 %v1069, %v1070
      %v1072 = vand.u32 %v1071, 4294901760
      %1073 = vmatpush1.msra.mxu0 %v1072
      %1074 = vmatprep.subr.mxu0 0.0
      %v1075 = vand.u32 %v948, 4294901760
      %v1076 = vsub.f32 %v948, %v1075
      %v1077 = vand.u32 %v1076, 4294901760
      %v1078 = vsub.f32 %v1076, %v1077
      %v1079 = vand.u32 %v1078, 4294901760
      %1080 = vmatpush1.msra.mxu0 %v1079
      %1081 = vmatprep.subr.mxu0 0.0
      %v1082 = vand.u32 %v949, 4294901760
      %v1083 = vsub.f32 %v949, %v1082
      %v1084 = vand.u32 %v1083, 4294901760
      %v1085 = vsub.f32 %v1083, %v1084
      %v1086 = vand.u32 %v1085, 4294901760
      %1087 = vmatpush1.msra.mxu0 %v1086
      %1088 = vmatprep.subr.mxu0 0.0
      %v1089 = vand.u32 %v950, 4294901760
      %v1090 = vsub.f32 %v950, %v1089
      %v1091 = vand.u32 %v1090, 4294901760
      %v1092 = vsub.f32 %v1090, %v1091
      %v1093 = vand.u32 %v1092, 4294901760
      %1094 = vmatpush1.msra.mxu0 %v1093
      %1095 = vmatprep.subr.mxu0 0.0
      %v1096 = vand.u32 %v951, 4294901760
      %v1097 = vsub.f32 %v951, %v1096
      %v1098 = vand.u32 %v1097, 4294901760
      %v1099 = vsub.f32 %v1097, %v1098
      %v1100 = vand.u32 %v1099, 4294901760
      %1101 = vmatpush1.msra.mxu0 %v1100
      %1102 = vmatprep.subr.mxu0 0.0
      %v1103 = vand.u32 %v952, 4294901760
      %v1104 = vsub.f32 %v952, %v1103
      %v1105 = vand.u32 %v1104, 4294901760
      %v1106 = vsub.f32 %v1104, %v1105
      %v1107 = vand.u32 %v1106, 4294901760
      %1108 = vmatpush1.msra.mxu0 %v1107
      %1109 = vmatprep.subr.mxu0 0.0
      %v1110 = vand.u32 %v953, 4294901760
      %v1111 = vsub.f32 %v953, %v1110
      %v1112 = vand.u32 %v1111, 4294901760
      %v1113 = vsub.f32 %v1111, %v1112
      %v1114 = vand.u32 %v1113, 4294901760
      %1115 = vmatpush1.msra.mxu0 %v1114
      %1116 = vmatprep.subr.mxu0 0.0
      %v1117 = vand.u32 %v954, 4294901760
      %v1118 = vsub.f32 %v954, %v1117
      %v1119 = vand.u32 %v1118, 4294901760
      %v1120 = vsub.f32 %v1118, %v1119
      %v1121 = vand.u32 %v1120, 4294901760
      %1122 = vmatpush1.msra.mxu0 %v1121
      %1123 = vmatprep.subr.mxu0 0.0
      %v1124 = vand.u32 %v955, 4294901760
      %v1125 = vsub.f32 %v955, %v1124
      %v1126 = vand.u32 %v1125, 4294901760
      %v1127 = vsub.f32 %v1125, %v1126
      %v1128 = vand.u32 %v1127, 4294901760
      %1129 = vmatpush1.msra.mxu0 %v1128
      %1130 = vmatprep.subr.mxu0 0.0
      %v1131 = vand.u32 %v956, 4294901760
      %v1132 = vsub.f32 %v956, %v1131
      %v1133 = vand.u32 %v1132, 4294901760
      %v1134 = vsub.f32 %v1132, %v1133
      %v1135 = vand.u32 %v1134, 4294901760
      %1136 = vmatpush1.msra.mxu0 %v1135
      %1137 = vmatprep.subr.mxu0 0.0
      %v1138 = vand.u32 %v957, 4294901760
      %v1139 = vsub.f32 %v957, %v1138
      %v1140 = vand.u32 %v1139, 4294901760
      %v1141 = vsub.f32 %v1139, %v1140
      %v1142 = vand.u32 %v1141, 4294901760
      %1143 = vmatpush1.msra.mxu0 %v1142
      %1144 = vmatprep.subr.mxu0 0.0
      %v1145 = vand.u32 %v958, 4294901760
      %v1146 = vsub.f32 %v958, %v1145
      %v1147 = vand.u32 %v1146, 4294901760
      %v1148 = vsub.f32 %v1146, %v1147
      %v1149 = vand.u32 %v1148, 4294901760
      %1150 = vmatpush1.msra.mxu0 %v1149
      %1151 = vmatprep.subr.mxu0 0.0
      %v1152 = vand.u32 %v959, 4294901760
      %v1153 = vsub.f32 %v959, %v1152
      %v1154 = vand.u32 %v1153, 4294901760
      %v1155 = vsub.f32 %v1153, %v1154
      %v1156 = vand.u32 %v1155, 4294901760
      %1157 = vmatpush1.msra.mxu0 %v1156
      %1158 = vmatprep.subr.mxu0 0.0
      %v1159 = vand.u32 %v960, 4294901760
      %v1160 = vsub.f32 %v960, %v1159
      %v1161 = vand.u32 %v1160, 4294901760
      %v1162 = vsub.f32 %v1160, %v1161
      %v1163 = vand.u32 %v1162, 4294901760
      %1164 = vmatpush1.msra.mxu0 %v1163
      %1165 = vmatprep.subr.mxu0 0.0
      %v1166 = vand.u32 %v961, 4294901760
      %v1167 = vsub.f32 %v961, %v1166
      %v1168 = vand.u32 %v1167, 4294901760
      %v1169 = vsub.f32 %v1167, %v1168
      %v1170 = vand.u32 %v1169, 4294901760
      %1171 = vmatpush1.msra.mxu0 %v1170
      %1172 = vmatprep.subr.mxu0 0.0
      %1173 = vmatpush1.msra.mxu0 0.0
      %1174 = vmatprep.subr.mxu0 0.0
      %1175 = vmatpush1.msra.mxu0 0.0
      %1176 = vmatprep.subr.mxu0 0.0
      %1177 = vmatpush1.msra.mxu0 0.0
      %1178 = vmatprep.subr.mxu0 0.0
      %1179 = vmatpush1.msra.mxu0 0.0
      %1180 = vmatprep.subr.mxu0 0.0
      %1181 = vmatpush1.msra.mxu0 0.0
      %1182 = vmatprep.subr.mxu0 0.0
      %1183 = vmatpush1.msra.mxu0 0.0
      %1184 = vmatprep.subr.mxu0 0.0
      %1185 = vmatpush1.msra.mxu0 0.0
      %1186 = vmatprep.subr.mxu0 0.0
      %1187 = vmatpush1.msra.mxu0 0.0
      %1188 = vmatprep.subr.mxu0 0.0
      %1189 = vmatpush1.msra.mxu0 0.0
      %1190 = vmatprep.subr.mxu0 0.0
      %1191 = vmatpush1.msra.mxu0 0.0
      %1192 = vmatprep.subr.mxu0 0.0
      %1193 = vmatpush1.msra.mxu0 0.0
      %1194 = vmatprep.subr.mxu0 0.0
      %1195 = vmatpush1.msra.mxu0 0.0
      %1196 = vmatprep.subr.mxu0 0.0
      %1197 = vmatpush1.msra.mxu0 0.0
      %1198 = vmatprep.subr.mxu0 0.0
      %1199 = vmatpush1.msra.mxu0 0.0
      %1200 = vmatprep.subr.mxu0 0.0
      %1201 = vmatpush1.msra.mxu0 0.0
      %1202 = vmatprep.subr.mxu0 0.0
      %1203 = vmatpush1.msra.mxu0 0.0
      %1204 = vmatprep.mubr.f32.mxu0 0.0
      %v1205 = vand.u32 %v943, 4294901760
      %1206 = vmatmul.mubr.f32.gmra.mrb[0].mxu0 %v1205
      %v1207 = vpop.f32.mrb[0].mxu0
      %v1208 = vadd.f32 %v1057, %v1207
      %v1209 = vpop.f32.mrb[0].mxu0
      %1210 = vdwg.mxu0
      %1211 = vmatprep.subr.mxu0 0.0
      %v1212 = vand.u32 %v946, 4294901760
      %v1213 = vsub.f32 %v946, %v1212
      %1214 = vmatpush1.msra.mxu0 %v1213
      %1215 = vmatprep.subr.mxu0 0.0
      %v1216 = vand.u32 %v947, 4294901760
      %v1217 = vsub.f32 %v947, %v1216
      %1218 = vmatpush1.msra.mxu0 %v1217
      %1219 = vmatprep.subr.mxu0 0.0
      %v1220 = vand.u32 %v948, 4294901760
      %v1221 = vsub.f32 %v948, %v1220
      %1222 = vmatpush1.msra.mxu0 %v1221
      %1223 = vmatprep.subr.mxu0 0.0
      %v1224 = vand.u32 %v949, 4294901760
      %v1225 = vsub.f32 %v949, %v1224
      %1226 = vmatpush1.msra.mxu0 %v1225
      %1227 = vmatprep.subr.mxu0 0.0
      %v1228 = vand.u32 %v950, 4294901760
      %v1229 = vsub.f32 %v950, %v1228
      %1230 = vmatpush1.msra.mxu0 %v1229
      %1231 = vmatprep.subr.mxu0 0.0
      %v1232 = vand.u32 %v951, 4294901760
      %v1233 = vsub.f32 %v951, %v1232
      %1234 = vmatpush1.msra.mxu0 %v1233
      %1235 = vmatprep.subr.mxu0 0.0
      %v1236 = vand.u32 %v952, 4294901760
      %v1237 = vsub.f32 %v952, %v1236
      %1238 = vmatpush1.msra.mxu0 %v1237
      %1239 = vmatprep.subr.mxu0 0.0
      %v1240 = vand.u32 %v953, 4294901760
      %v1241 = vsub.f32 %v953, %v1240
      %1242 = vmatpush1.msra.mxu0 %v1241
      %1243 = vmatprep.subr.mxu0 0.0
      %v1244 = vand.u32 %v954, 4294901760
      %v1245 = vsub.f32 %v954, %v1244
      %1246 = vmatpush1.msra.mxu0 %v1245
      %1247 = vmatprep.subr.mxu0 0.0
      %v1248 = vand.u32 %v955, 4294901760
      %v1249 = vsub.f32 %v955, %v1248
      %1250 = vmatpush1.msra.mxu0 %v1249
      %1251 = vmatprep.subr.mxu0 0.0
      %v1252 = vand.u32 %v956, 4294901760
      %v1253 = vsub.f32 %v956, %v1252
      %1254 = vmatpush1.msra.mxu0 %v1253
      %1255 = vmatprep.subr.mxu0 0.0
      %v1256 = vand.u32 %v957, 4294901760
      %v1257 = vsub.f32 %v957, %v1256
      %1258 = vmatpush1.msra.mxu0 %v1257
      %1259 = vmatprep.subr.mxu0 0.0
      %v1260 = vand.u32 %v958, 4294901760
      %v1261 = vsub.f32 %v958, %v1260
      %1262 = vmatpush1.msra.mxu0 %v1261
      %1263 = vmatprep.subr.mxu0 0.0
      %v1264 = vand.u32 %v959, 4294901760
      %v1265 = vsub.f32 %v959, %v1264
      %1266 = vmatpush1.msra.mxu0 %v1265
      %1267 = vmatprep.subr.mxu0 0.0
      %v1268 = vand.u32 %v960, 4294901760
      %v1269 = vsub.f32 %v960, %v1268
      %1270 = vmatpush1.msra.mxu0 %v1269
      %1271 = vmatprep.subr.mxu0 0.0
      %v1272 = vand.u32 %v961, 4294901760
      %v1273 = vsub.f32 %v961, %v1272
      %1274 = vmatpush1.msra.mxu0 %v1273
      %1275 = vmatprep.subr.mxu0 0.0
      %1276 = vmatpush1.msra.mxu0 0.0
      %1277 = vmatprep.subr.mxu0 0.0
      %1278 = vmatpush1.msra.mxu0 0.0
      %1279 = vmatprep.subr.mxu0 0.0
      %1280 = vmatpush1.msra.mxu0 0.0
      %1281 = vmatprep.subr.mxu0 0.0
      %1282 = vmatpush1.msra.mxu0 0.0
      %1283 = vmatprep.subr.mxu0 0.0
      %1284 = vmatpush1.msra.mxu0 0.0
      %1285 = vmatprep.subr.mxu0 0.0
      %1286 = vmatpush1.msra.mxu0 0.0
      %1287 = vmatprep.subr.mxu0 0.0
      %1288 = vmatpush1.msra.mxu0 0.0
      %1289 = vmatprep.subr.mxu0 0.0
      %1290 = vmatpush1.msra.mxu0 0.0
      %1291 = vmatprep.subr.mxu0 0.0
      %1292 = vmatpush1.msra.mxu0 0.0
      %1293 = vmatprep.subr.mxu0 0.0
      %1294 = vmatpush1.msra.mxu0 0.0
      %1295 = vmatprep.subr.mxu0 0.0
      %1296 = vmatpush1.msra.mxu0 0.0
      %1297 = vmatprep.subr.mxu0 0.0
      %1298 = vmatpush1.msra.mxu0 0.0
      %1299 = vmatprep.subr.mxu0 0.0
      %1300 = vmatpush1.msra.mxu0 0.0
      %1301 = vmatprep.subr.mxu0 0.0
      %1302 = vmatpush1.msra.mxu0 0.0
      %1303 = vmatprep.subr.mxu0 0.0
      %1304 = vmatpush1.msra.mxu0 0.0
      %1305 = vmatprep.subr.mxu0 0.0
      %1306 = vmatpush1.msra.mxu0 0.0
      %1307 = vmatprep.mubr.f32.mxu0 0.0
      %v1308 = vand.u32 %v943, 4294901760
      %v1309 = vsub.f32 %v943, %v1308
      %1310 = vmatmul.mubr.f32.gmra.mrb[0].mxu0 %v1309
      %v1311 = vpop.f32.mrb[0].mxu0
      %v1312 = vadd.f32 %v1208, %v1311
      %v1313 = vpop.f32.mrb[0].mxu0
      %1314 = vdwg.mxu0
      %1315 = vmatprep.subr.mxu0 0.0
      %v1316 = vand.u32 %v946, 4294901760
      %1317 = vmatpush1.msra.mxu0 %v1316
      %1318 = vmatprep.subr.mxu0 0.0
      %v1319 = vand.u32 %v947, 4294901760
      %1320 = vmatpush1.msra.mxu0 %v1319
      %1321 = vmatprep.subr.mxu0 0.0
      %v1322 = vand.u32 %v948, 4294901760
      %1323 = vmatpush1.msra.mxu0 %v1322
      %1324 = vmatprep.subr.mxu0 0.0
      %v1325 = vand.u32 %v949, 4294901760
      %1326 = vmatpush1.msra.mxu0 %v1325
      %1327 = vmatprep.subr.mxu0 0.0
      %v1328 = vand.u32 %v950, 4294901760
      %1329 = vmatpush1.msra.mxu0 %v1328
      %1330 = vmatprep.subr.mxu0 0.0
      %v1331 = vand.u32 %v951, 4294901760
      %1332 = vmatpush1.msra.mxu0 %v1331
      %1333 = vmatprep.subr.mxu0 0.0
      %v1334 = vand.u32 %v952, 4294901760
      %1335 = vmatpush1.msra.mxu0 %v1334
      %1336 = vmatprep.subr.mxu0 0.0
      %v1337 = vand.u32 %v953, 4294901760
      %1338 = vmatpush1.msra.mxu0 %v1337
      %1339 = vmatprep.subr.mxu0 0.0
      %v1340 = vand.u32 %v954, 4294901760
      %1341 = vmatpush1.msra.mxu0 %v1340
      %1342 = vmatprep.subr.mxu0 0.0
      %v1343 = vand.u32 %v955, 4294901760
      %1344 = vmatpush1.msra.mxu0 %v1343
      %1345 = vmatprep.subr.mxu0 0.0
      %v1346 = vand.u32 %v956, 4294901760
      %1347 = vmatpush1.msra.mxu0 %v1346
      %1348 = vmatprep.subr.mxu0 0.0
      %v1349 = vand.u32 %v957, 4294901760
      %1350 = vmatpush1.msra.mxu0 %v1349
      %1351 = vmatprep.subr.mxu0 0.0
      %v1352 = vand.u32 %v958, 4294901760
      %1353 = vmatpush1.msra.mxu0 %v1352
      %1354 = vmatprep.subr.mxu0 0.0
      %v1355 = vand.u32 %v959, 4294901760
      %1356 = vmatpush1.msra.mxu0 %v1355
      %1357 = vmatprep.subr.mxu0 0.0
      %v1358 = vand.u32 %v960, 4294901760
      %1359 = vmatpush1.msra.mxu0 %v1358
      %1360 = vmatprep.subr.mxu0 0.0
      %v1361 = vand.u32 %v961, 4294901760
      %1362 = vmatpush1.msra.mxu0 %v1361
      %1363 = vmatprep.subr.mxu0 0.0
      %1364 = vmatpush1.msra.mxu0 0.0
      %1365 = vmatprep.subr.mxu0 0.0
      %1366 = vmatpush1.msra.mxu0 0.0
      %1367 = vmatprep.subr.mxu0 0.0
      %1368 = vmatpush1.msra.mxu0 0.0
      %1369 = vmatprep.subr.mxu0 0.0
      %1370 = vmatpush1.msra.mxu0 0.0
      %1371 = vmatprep.subr.mxu0 0.0
      %1372 = vmatpush1.msra.mxu0 0.0
      %1373 = vmatprep.subr.mxu0 0.0
      %1374 = vmatpush1.msra.mxu0 0.0
      %1375 = vmatprep.subr.mxu0 0.0
      %1376 = vmatpush1.msra.mxu0 0.0
      %1377 = vmatprep.subr.mxu0 0.0
      %1378 = vmatpush1.msra.mxu0 0.0
      %1379 = vmatprep.subr.mxu0 0.0
      %1380 = vmatpush1.msra.mxu0 0.0
      %1381 = vmatprep.subr.mxu0 0.0
      %1382 = vmatpush1.msra.mxu0 0.0
      %1383 = vmatprep.subr.mxu0 0.0
      %1384 = vmatpush1.msra.mxu0 0.0
      %1385 = vmatprep.subr.mxu0 0.0
      %1386 = vmatpush1.msra.mxu0 0.0
      %1387 = vmatprep.subr.mxu0 0.0
      %1388 = vmatpush1.msra.mxu0 0.0
      %1389 = vmatprep.subr.mxu0 0.0
      %1390 = vmatpush1.msra.mxu0 0.0
      %1391 = vmatprep.subr.mxu0 0.0
      %1392 = vmatpush1.msra.mxu0 0.0
      %1393 = vmatprep.subr.mxu0 0.0
      %1394 = vmatpush1.msra.mxu0 0.0
      %1395 = vmatprep.mubr.f32.mxu0 0.0
      %v1396 = vand.u32 %v943, 4294901760
      %v1397 = vsub.f32 %v943, %v1396
      %v1398 = vand.u32 %v1397, 4294901760
      %1399 = vmatmul.mubr.f32.gmra.mrb[0].mxu0 %v1398
      %v1400 = vpop.f32.mrb[0].mxu0
      %v1401 = vadd.f32 %v1312, %v1400
      %v1402 = vpop.f32.mrb[0].mxu0
      %1403 = vdwg.mxu0
      %1404 = vmatprep.subr.mxu0 0.0
      %v1405 = vand.u32 %v946, 4294901760
      %v1406 = vsub.f32 %v946, %v1405
      %v1407 = vand.u32 %v1406, 4294901760
      %1408 = vmatpush1.msra.mxu0 %v1407
      %1409 = vmatprep.subr.mxu0 0.0
      %v1410 = vand.u32 %v947, 4294901760
      %v1411 = vsub.f32 %v947, %v1410
      %v1412 = vand.u32 %v1411, 4294901760
      %1413 = vmatpush1.msra.mxu0 %v1412
      %1414 = vmatprep.subr.mxu0 0.0
      %v1415 = vand.u32 %v948, 4294901760
      %v1416 = vsub.f32 %v948, %v1415
      %v1417 = vand.u32 %v1416, 4294901760
      %1418 = vmatpush1.msra.mxu0 %v1417
      %1419 = vmatprep.subr.mxu0 0.0
      %v1420 = vand.u32 %v949, 4294901760
      %v1421 = vsub.f32 %v949, %v1420
      %v1422 = vand.u32 %v1421, 4294901760
      %1423 = vmatpush1.msra.mxu0 %v1422
      %1424 = vmatprep.subr.mxu0 0.0
      %v1425 = vand.u32 %v950, 4294901760
      %v1426 = vsub.f32 %v950, %v1425
      %v1427 = vand.u32 %v1426, 4294901760
      %1428 = vmatpush1.msra.mxu0 %v1427
      %1429 = vmatprep.subr.mxu0 0.0
      %v1430 = vand.u32 %v951, 4294901760
      %v1431 = vsub.f32 %v951, %v1430
      %v1432 = vand.u32 %v1431, 4294901760
      %1433 = vmatpush1.msra.mxu0 %v1432
      %1434 = vmatprep.subr.mxu0 0.0
      %v1435 = vand.u32 %v952, 4294901760
      %v1436 = vsub.f32 %v952, %v1435
      %v1437 = vand.u32 %v1436, 4294901760
      %1438 = vmatpush1.msra.mxu0 %v1437
      %1439 = vmatprep.subr.mxu0 0.0
      %v1440 = vand.u32 %v953, 4294901760
      %v1441 = vsub.f32 %v953, %v1440
      %v1442 = vand.u32 %v1441, 4294901760
      %1443 = vmatpush1.msra.mxu0 %v1442
      %1444 = vmatprep.subr.mxu0 0.0
      %v1445 = vand.u32 %v954, 4294901760
      %v1446 = vsub.f32 %v954, %v1445
      %v1447 = vand.u32 %v1446, 4294901760
      %1448 = vmatpush1.msra.mxu0 %v1447
      %1449 = vmatprep.subr.mxu0 0.0
      %v1450 = vand.u32 %v955, 4294901760
      %v1451 = vsub.f32 %v955, %v1450
      %v1452 = vand.u32 %v1451, 4294901760
      %1453 = vmatpush1.msra.mxu0 %v1452
      %1454 = vmatprep.subr.mxu0 0.0
      %v1455 = vand.u32 %v956, 4294901760
      %v1456 = vsub.f32 %v956, %v1455
      %v1457 = vand.u32 %v1456, 4294901760
      %1458 = vmatpush1.msra.mxu0 %v1457
      %1459 = vmatprep.subr.mxu0 0.0
      %v1460 = vand.u32 %v957, 4294901760
      %v1461 = vsub.f32 %v957, %v1460
      %v1462 = vand.u32 %v1461, 4294901760
      %1463 = vmatpush1.msra.mxu0 %v1462
      %1464 = vmatprep.subr.mxu0 0.0
      %v1465 = vand.u32 %v958, 4294901760
      %v1466 = vsub.f32 %v958, %v1465
      %v1467 = vand.u32 %v1466, 4294901760
      %1468 = vmatpush1.msra.mxu0 %v1467
      %1469 = vmatprep.subr.mxu0 0.0
      %v1470 = vand.u32 %v959, 4294901760
      %v1471 = vsub.f32 %v959, %v1470
      %v1472 = vand.u32 %v1471, 4294901760
      %1473 = vmatpush1.msra.mxu0 %v1472
      %1474 = vmatprep.subr.mxu0 0.0
      %v1475 = vand.u32 %v960, 4294901760
      %v1476 = vsub.f32 %v960, %v1475
      %v1477 = vand.u32 %v1476, 4294901760
      %1478 = vmatpush1.msra.mxu0 %v1477
      %1479 = vmatprep.subr.mxu0 0.0
      %v1480 = vand.u32 %v961, 4294901760
      %v1481 = vsub.f32 %v961, %v1480
      %v1482 = vand.u32 %v1481, 4294901760
      %1483 = vmatpush1.msra.mxu0 %v1482
      %1484 = vmatprep.subr.mxu0 0.0
      %1485 = vmatpush1.msra.mxu0 0.0
      %1486 = vmatprep.subr.mxu0 0.0
      %1487 = vmatpush1.msra.mxu0 0.0
      %1488 = vmatprep.subr.mxu0 0.0
      %1489 = vmatpush1.msra.mxu0 0.0
      %1490 = vmatprep.subr.mxu0 0.0
      %1491 = vmatpush1.msra.mxu0 0.0
      %1492 = vmatprep.subr.mxu0 0.0
      %1493 = vmatpush1.msra.mxu0 0.0
      %1494 = vmatprep.subr.mxu0 0.0
      %1495 = vmatpush1.msra.mxu0 0.0
      %1496 = vmatprep.subr.mxu0 0.0
      %1497 = vmatpush1.msra.mxu0 0.0
      %1498 = vmatprep.subr.mxu0 0.0
      %1499 = vmatpush1.msra.mxu0 0.0
      %1500 = vmatprep.subr.mxu0 0.0
      %1501 = vmatpush1.msra.mxu0 0.0
      %1502 = vmatprep.subr.mxu0 0.0
      %1503 = vmatpush1.msra.mxu0 0.0
      %1504 = vmatprep.subr.mxu0 0.0
      %1505 = vmatpush1.msra.mxu0 0.0
      %1506 = vmatprep.subr.mxu0 0.0
      %1507 = vmatpush1.msra.mxu0 0.0
      %1508 = vmatprep.subr.mxu0 0.0
      %1509 = vmatpush1.msra.mxu0 0.0
      %1510 = vmatprep.subr.mxu0 0.0
      %1511 = vmatpush1.msra.mxu0 0.0
      %1512 = vmatprep.subr.mxu0 0.0
      %1513 = vmatpush1.msra.mxu0 0.0
      %1514 = vmatprep.subr.mxu0 0.0
      %1515 = vmatpush1.msra.mxu0 0.0
      %1516 = vmatprep.mubr.f32.mxu0 0.0
      %v1517 = vand.u32 %v943, 4294901760
      %1518 = vmatmul.mubr.f32.gmra.mrb[0].mxu0 %v1517
      %v1519 = vpop.f32.mrb[0].mxu0
      %v1520 = vadd.f32 %v1401, %v1519
      %v1521 = vpop.f32.mrb[0].mxu0
      %1522 = vdwg.mxu0
      %1523 = vmatprep.subr.mxu0 0.0
      %v1524 = vand.u32 %v946, 4294901760
      %1525 = vmatpush1.msra.mxu0 %v1524
      %1526 = vmatprep.subr.mxu0 0.0
      %v1527 = vand.u32 %v947, 4294901760
      %1528 = vmatpush1.msra.mxu0 %v1527
      %1529 = vmatprep.subr.mxu0 0.0
      %v1530 = vand.u32 %v948, 4294901760
      %1531 = vmatpush1.msra.mxu0 %v1530
      %1532 = vmatprep.subr.mxu0 0.0
      %v1533 = vand.u32 %v949, 4294901760
      %1534 = vmatpush1.msra.mxu0 %v1533
      %1535 = vmatprep.subr.mxu0 0.0
      %v1536 = vand.u32 %v950, 4294901760
      %1537 = vmatpush1.msra.mxu0 %v1536
      %1538 = vmatprep.subr.mxu0 0.0
      %v1539 = vand.u32 %v951, 4294901760
      %1540 = vmatpush1.msra.mxu0 %v1539
      %1541 = vmatprep.subr.mxu0 0.0
      %v1542 = vand.u32 %v952, 4294901760
      %1543 = vmatpush1.msra.mxu0 %v1542
      %1544 = vmatprep.subr.mxu0 0.0
      %v1545 = vand.u32 %v953, 4294901760
      %1546 = vmatpush1.msra.mxu0 %v1545
      %1547 = vmatprep.subr.mxu0 0.0
      %v1548 = vand.u32 %v954, 4294901760
      %1549 = vmatpush1.msra.mxu0 %v1548
      %1550 = vmatprep.subr.mxu0 0.0
      %v1551 = vand.u32 %v955, 4294901760
      %1552 = vmatpush1.msra.mxu0 %v1551
      %1553 = vmatprep.subr.mxu0 0.0
      %v1554 = vand.u32 %v956, 4294901760
      %1555 = vmatpush1.msra.mxu0 %v1554
      %1556 = vmatprep.subr.mxu0 0.0
      %v1557 = vand.u32 %v957, 4294901760
      %1558 = vmatpush1.msra.mxu0 %v1557
      %1559 = vmatprep.subr.mxu0 0.0
      %v1560 = vand.u32 %v958, 4294901760
      %1561 = vmatpush1.msra.mxu0 %v1560
      %1562 = vmatprep.subr.mxu0 0.0
      %v1563 = vand.u32 %v959, 4294901760
      %1564 = vmatpush1.msra.mxu0 %v1563
      %1565 = vmatprep.subr.mxu0 0.0
      %v1566 = vand.u32 %v960, 4294901760
      %1567 = vmatpush1.msra.mxu0 %v1566
      %1568 = vmatprep.subr.mxu0 0.0
      %v1569 = vand.u32 %v961, 4294901760
      %1570 = vmatpush1.msra.mxu0 %v1569
      %1571 = vmatprep.subr.mxu0 0.0
      %1572 = vmatpush1.msra.mxu0 0.0
      %1573 = vmatprep.subr.mxu0 0.0
      %1574 = vmatpush1.msra.mxu0 0.0
      %1575 = vmatprep.subr.mxu0 0.0
      %1576 = vmatpush1.msra.mxu0 0.0
      %1577 = vmatprep.subr.mxu0 0.0
      %1578 = vmatpush1.msra.mxu0 0.0
      %1579 = vmatprep.subr.mxu0 0.0
      %1580 = vmatpush1.msra.mxu0 0.0
      %1581 = vmatprep.subr.mxu0 0.0
      %1582 = vmatpush1.msra.mxu0 0.0
      %1583 = vmatprep.subr.mxu0 0.0
      %1584 = vmatpush1.msra.mxu0 0.0
      %1585 = vmatprep.subr.mxu0 0.0
      %1586 = vmatpush1.msra.mxu0 0.0
      %1587 = vmatprep.subr.mxu0 0.0
      %1588 = vmatpush1.msra.mxu0 0.0
      %1589 = vmatprep.subr.mxu0 0.0
      %1590 = vmatpush1.msra.mxu0 0.0
      %1591 = vmatprep.subr.mxu0 0.0
      %1592 = vmatpush1.msra.mxu0 0.0
      %1593 = vmatprep.subr.mxu0 0.0
      %1594 = vmatpush1.msra.mxu0 0.0
      %1595 = vmatprep.subr.mxu0 0.0
      %1596 = vmatpush1.msra.mxu0 0.0
      %1597 = vmatprep.subr.mxu0 0.0
      %1598 = vmatpush1.msra.mxu0 0.0
      %1599 = vmatprep.subr.mxu0 0.0
      %1600 = vmatpush1.msra.mxu0 0.0
      %1601 = vmatprep.subr.mxu0 0.0
      %1602 = vmatpush1.msra.mxu0 0.0
      %1603 = vmatprep.mubr.f32.mxu0 0.0
      %v1604 = vand.u32 %v943, 4294901760
      %1605 = vmatmul.mubr.f32.gmra.mrb[0].mxu0 %v1604
      %v1606 = vpop.f32.mrb[0].mxu0
      %v1607 = vadd.f32 %v1520, %v1606
      %v1608 = vpop.f32.mrb[0].mxu0
      %1609 = vdwg.mxu0
      %vm1610 = vcmask 1041408
      %v1611 = vsel %vm1610, %v1607, 0.0
      %v1612 = vrot.slane %v1611, 4
      %v1613 = vadd.f32 %v1611, %v1612
      %v1614 = vrot.slane %v1613, 2
      %v1615 = vadd.f32 %v1613, %v1614
      %v1616 = vrot.slane %v1615, 1
      %v1617 = vadd.f32 %v1615, %v1616
      %v1618 = vrcp.pop 2.0
      %v1619 = vmul.f32 %v1617, %v1618
      %v1620 = vsub.f32 %v1607, %v1619
      %v1621 = vmul.f32 %v1620, %v1620
      %v1622 = vsel %vm1610, %v1621, 0.0
      %v1623 = vrot.slane %v1622, 4
      %v1624 = vadd.f32 %v1622, %v1623
      %v1625 = vrot.slane %v1624, 2
      %v1626 = vadd.f32 %v1624, %v1625
      %v1627 = vrot.slane %v1626, 1
      %v1628 = vadd.f32 %v1626, %v1627
      %v1629 = vmul.f32 %v1628, %v1618
      %v1630 = vadd.f32 %v1629, 1e-05
      %v1631 = vrsqrt.pop %v1630
      %v1632 = vmul.f32 %v1620, %v1631
      %v1633 = vld [vmem:[%s5] sm:$0x1]
      %v1635 = vlaneseq
      %v1636 = vshrl.u32 %v1635, 7
      %v1637 = vsub.s32 0, %v1636
      %v1638 = vrot.slane %v1633, %v1637
      %v1640 = vmul.f32 %v1632, %v1638
      %v1641 = vld [vmem:[%s6] sm:$0x1]
      %v1643 = vlaneseq
      %v1644 = vshrl.u32 %v1643, 7
      %v1645 = vsub.s32 0, %v1644
      %v1646 = vrot.slane %v1641, %v1645
      %v1648 = vadd.f32 %v1640, %v1646
      %v1649 = vmax.f32 %v1648, 0.0
      %v1650 = vld [vmem:[%s7] sm:$0xff]
      %v1651 = vld [vmem:[%s7 + $0x8] sm:$0xff]
      %v1652 = vld [vmem:[%s7 + $0x10] sm:$0xff]
      %v1653 = vld [vmem:[%s7 + $0x18] sm:$0xff]
      %v1654 = vld [vmem:[%s7 + $0x20] sm:$0xff]
      %v1655 = vld [vmem:[%s7 + $0x28] sm:$0xff]
      %v1656 = vld [vmem:[%s7 + $0x30] sm:$0xff]
      %v1657 = vld [vmem:[%s7 + $0x38] sm:$0xff]
      %v1658 = vld [vmem:[%s7 + $0x40] sm:$0xff]
      %v1659 = vld [vmem:[%s7 + $0x48] sm:$0xff]
      %v1660 = vld [vmem:[%s7 + $0x50] sm:$0xff]
      %v1661 = vld [vmem:[%s7 + $0x58] sm:$0xff]
      %v1662 = vld [vmem:[%s7 + $0x60] sm:$0xff]
      %v1663 = vld [vmem:[%s7 + $0x68] sm:$0xff]
      %v1664 = vld [vmem:[%s7 + $0x70] sm:$0xff]
      %v1665 = vld [vmem:[%s7 + $0x78] sm:$0xff]
      %v1666 = vld [vmem:[%s8] sm:$0x1]
      %v1668 = vlaneseq
      %v1669 = vshrl.u32 %v1668, 7
      %v1670 = vsub.s32 0, %v1669
      %v1671 = vrot.slane %v1666, %v1670
      %1673 = vmatprep.subr.mxu0 0.0
      %v1674 = vand.u32 %v1650, 4294901760
      %1675 = vmatpush1.msra.mxu0 %v1674
      %1676 = vmatprep.subr.mxu0 0.0
      %v1677 = vand.u32 %v1651, 4294901760
      %1678 = vmatpush1.msra.mxu0 %v1677
      %1679 = vmatprep.subr.mxu0 0.0
      %v1680 = vand.u32 %v1652, 4294901760
      %1681 = vmatpush1.msra.mxu0 %v1680
      %1682 = vmatprep.subr.mxu0 0.0
      %v1683 = vand.u32 %v1653, 4294901760
      %1684 = vmatpush1.msra.mxu0 %v1683
      %1685 = vmatprep.subr.mxu0 0.0
      %v1686 = vand.u32 %v1654, 4294901760
      %1687 = vmatpush1.msra.mxu0 %v1686
      %1688 = vmatprep.subr.mxu0 0.0
      %v1689 = vand.u32 %v1655, 4294901760
      %1690 = vmatpush1.msra.mxu0 %v1689
      %1691 = vmatprep.subr.mxu0 0.0
      %v1692 = vand.u32 %v1656, 4294901760
      %1693 = vmatpush1.msra.mxu0 %v1692
      %1694 = vmatprep.subr.mxu0 0.0
      %v1695 = vand.u32 %v1657, 4294901760
      %1696 = vmatpush1.msra.mxu0 %v1695
      %1697 = vmatprep.subr.mxu0 0.0
      %v1698 = vand.u32 %v1658, 4294901760
      %1699 = vmatpush1.msra.mxu0 %v1698
      %1700 = vmatprep.subr.mxu0 0.0
      %v1701 = vand.u32 %v1659, 4294901760
      %1702 = vmatpush1.msra.mxu0 %v1701
      %1703 = vmatprep.subr.mxu0 0.0
      %v1704 = vand.u32 %v1660, 4294901760
      %1705 = vmatpush1.msra.mxu0 %v1704
      %1706 = vmatprep.subr.mxu0 0.0
      %v1707 = vand.u32 %v1661, 4294901760
      %1708 = vmatpush1.msra.mxu0 %v1707
      %1709 = vmatprep.subr.mxu0 0.0
      %v1710 = vand.u32 %v1662, 4294901760
      %1711 = vmatpush1.msra.mxu0 %v1710
      %1712 = vmatprep.subr.mxu0 0.0
      %v1713 = vand.u32 %v1663, 4294901760
      %1714 = vmatpush1.msra.mxu0 %v1713
      %1715 = vmatprep.subr.mxu0 0.0
      %v1716 = vand.u32 %v1664, 4294901760
      %1717 = vmatpush1.msra.mxu0 %v1716
      %1718 = vmatprep.subr.mxu0 0.0
      %v1719 = vand.u32 %v1665, 4294901760
      %1720 = vmatpush1.msra.mxu0 %v1719
      %1721 = vmatprep.subr.mxu0 0.0
      %1722 = vmatpush1.msra.mxu0 0.0
      %1723 = vmatprep.subr.mxu0 0.0
      %1724 = vmatpush1.msra.mxu0 0.0
      %1725 = vmatprep.subr.mxu0 0.0
      %1726 = vmatpush1.msra.mxu0 0.0
      %1727 = vmatprep.subr.mxu0 0.0
      %1728 = vmatpush1.msra.mxu0 0.0
      %1729 = vmatprep.subr.mxu0 0.0
      %1730 = vmatpush1.msra.mxu0 0.0
      %1731 = vmatprep.subr.mxu0 0.0
      %1732 = vmatpush1.msra.mxu0 0.0
      %1733 = vmatprep.subr.mxu0 0.0
      %1734 = vmatpush1.msra.mxu0 0.0
      %1735 = vmatprep.subr.mxu0 0.0
      %1736 = vmatpush1.msra.mxu0 0.0
      %1737 = vmatprep.subr.mxu0 0.0
      %1738 = vmatpush1.msra.mxu0 0.0
      %1739 = vmatprep.subr.mxu0 0.0
      %1740 = vmatpush1.msra.mxu0 0.0
      %1741 = vmatprep.subr.mxu0 0.0
      %1742 = vmatpush1.msra.mxu0 0.0
      %1743 = vmatprep.subr.mxu0 0.0
      %1744 = vmatpush1.msra.mxu0 0.0
      %1745 = vmatprep.subr.mxu0 0.0
      %1746 = vmatpush1.msra.mxu0 0.0
      %1747 = vmatprep.subr.mxu0 0.0
      %1748 = vmatpush1.msra.mxu0 0.0
      %1749 = vmatprep.subr.mxu0 0.0
      %1750 = vmatpush1.msra.mxu0 0.0
      %1751 = vmatprep.subr.mxu0 0.0
      %1752 = vmatpush1.msra.mxu0 0.0
      %1753 = vmatprep.mubr.f32.mxu0 0.0
      %v1754 = vand.u32 %v1649, 4294901760
      %v1755 = vsub.f32 %v1649, %v1754
      %v1756 = vand.u32 %v1755, 4294901760
      %v1757 = vsub.f32 %v1755, %v1756
      %v1758 = vand.u32 %v1757, 4294901760
      %1759 = vmatmul.mubr.f32.gmra.mrb[0].mxu0 %v1758
      %v1760 = vpop.f32.mrb[0].mxu0
      %v1761 = vadd.f32 %v1671, %v1760
      %v1762 = vpop.f32.mrb[0].mxu0
      %1763 = vdwg.mxu0
      %1764 = vmatprep.subr.mxu0 0.0
      %v1765 = vand.u32 %v1650, 4294901760
      %v1766 = vsub.f32 %v1650, %v1765
      %v1767 = vand.u32 %v1766, 4294901760
      %v1768 = vsub.f32 %v1766, %v1767
      %v1769 = vand.u32 %v1768, 4294901760
      %1770 = vmatpush1.msra.mxu0 %v1769
      %1771 = vmatprep.subr.mxu0 0.0
      %v1772 = vand.u32 %v1651, 4294901760
      %v1773 = vsub.f32 %v1651, %v1772
      %v1774 = vand.u32 %v1773, 4294901760
      %v1775 = vsub.f32 %v1773, %v1774
      %v1776 = vand.u32 %v1775, 4294901760
      %1777 = vmatpush1.msra.mxu0 %v1776
      %1778 = vmatprep.subr.mxu0 0.0
      %v1779 = vand.u32 %v1652, 4294901760
      %v1780 = vsub.f32 %v1652, %v1779
      %v1781 = vand.u32 %v1780, 4294901760
      %v1782 = vsub.f32 %v1780, %v1781
      %v1783 = vand.u32 %v1782, 4294901760
      %1784 = vmatpush1.msra.mxu0 %v1783
      %1785 = vmatprep.subr.mxu0 0.0
      %v1786 = vand.u32 %v1653, 4294901760
      %v1787 = vsub.f32 %v1653, %v1786
      %v1788 = vand.u32 %v1787, 4294901760
      %v1789 = vsub.f32 %v1787, %v1788
      %v1790 = vand.u32 %v1789, 4294901760
      %1791 = vmatpush1.msra.mxu0 %v1790
      %1792 = vmatprep.subr.mxu0 0.0
      %v1793 = vand.u32 %v1654, 4294901760
      %v1794 = vsub.f32 %v1654, %v1793
      %v1795 = vand.u32 %v1794, 4294901760
      %v1796 = vsub.f32 %v1794, %v1795
      %v1797 = vand.u32 %v1796, 4294901760
      %1798 = vmatpush1.msra.mxu0 %v1797
      %1799 = vmatprep.subr.mxu0 0.0
      %v1800 = vand.u32 %v1655, 4294901760
      %v1801 = vsub.f32 %v1655, %v1800
      %v1802 = vand.u32 %v1801, 4294901760
      %v1803 = vsub.f32 %v1801, %v1802
      %v1804 = vand.u32 %v1803, 4294901760
      %1805 = vmatpush1.msra.mxu0 %v1804
      %1806 = vmatprep.subr.mxu0 0.0
      %v1807 = vand.u32 %v1656, 4294901760
      %v1808 = vsub.f32 %v1656, %v1807
      %v1809 = vand.u32 %v1808, 4294901760
      %v1810 = vsub.f32 %v1808, %v1809
      %v1811 = vand.u32 %v1810, 4294901760
      %1812 = vmatpush1.msra.mxu0 %v1811
      %1813 = vmatprep.subr.mxu0 0.0
      %v1814 = vand.u32 %v1657, 4294901760
      %v1815 = vsub.f32 %v1657, %v1814
      %v1816 = vand.u32 %v1815, 4294901760
      %v1817 = vsub.f32 %v1815, %v1816
      %v1818 = vand.u32 %v1817, 4294901760
      %1819 = vmatpush1.msra.mxu0 %v1818
      %1820 = vmatprep.subr.mxu0 0.0
      %v1821 = vand.u32 %v1658, 4294901760
      %v1822 = vsub.f32 %v1658, %v1821
      %v1823 = vand.u32 %v1822, 4294901760
      %v1824 = vsub.f32 %v1822, %v1823
      %v1825 = vand.u32 %v1824, 4294901760
      %1826 = vmatpush1.msra.mxu0 %v1825
      %1827 = vmatprep.subr.mxu0 0.0
      %v1828 = vand.u32 %v1659, 4294901760
      %v1829 = vsub.f32 %v1659, %v1828
      %v1830 = vand.u32 %v1829, 4294901760
      %v1831 = vsub.f32 %v1829, %v1830
      %v1832 = vand.u32 %v1831, 4294901760
      %1833 = vmatpush1.msra.mxu0 %v1832
      %1834 = vmatprep.subr.mxu0 0.0
      %v1835 = vand.u32 %v1660, 4294901760
      %v1836 = vsub.f32 %v1660, %v1835
      %v1837 = vand.u32 %v1836, 4294901760
      %v1838 = vsub.f32 %v1836, %v1837
      %v1839 = vand.u32 %v1838, 4294901760
      %1840 = vmatpush1.msra.mxu0 %v1839
      %1841 = vmatprep.subr.mxu0 0.0
      %v1842 = vand.u32 %v1661, 4294901760
      %v1843 = vsub.f32 %v1661, %v1842
      %v1844 = vand.u32 %v1843, 4294901760
      %v1845 = vsub.f32 %v1843, %v1844
      %v1846 = vand.u32 %v1845, 4294901760
      %1847 = vmatpush1.msra.mxu0 %v1846
      %1848 = vmatprep.subr.mxu0 0.0
      %v1849 = vand.u32 %v1662, 4294901760
      %v1850 = vsub.f32 %v1662, %v1849
      %v1851 = vand.u32 %v1850, 4294901760
      %v1852 = vsub.f32 %v1850, %v1851
      %v1853 = vand.u32 %v1852, 4294901760
      %1854 = vmatpush1.msra.mxu0 %v1853
      %1855 = vmatprep.subr.mxu0 0.0
      %v1856 = vand.u32 %v1663, 4294901760
      %v1857 = vsub.f32 %v1663, %v1856
      %v1858 = vand.u32 %v1857, 4294901760
      %v1859 = vsub.f32 %v1857, %v1858
      %v1860 = vand.u32 %v1859, 4294901760
      %1861 = vmatpush1.msra.mxu0 %v1860
      %1862 = vmatprep.subr.mxu0 0.0
      %v1863 = vand.u32 %v1664, 4294901760
      %v1864 = vsub.f32 %v1664, %v1863
      %v1865 = vand.u32 %v1864, 4294901760
      %v1866 = vsub.f32 %v1864, %v1865
      %v1867 = vand.u32 %v1866, 4294901760
      %1868 = vmatpush1.msra.mxu0 %v1867
      %1869 = vmatprep.subr.mxu0 0.0
      %v1870 = vand.u32 %v1665, 4294901760
      %v1871 = vsub.f32 %v1665, %v1870
      %v1872 = vand.u32 %v1871, 4294901760
      %v1873 = vsub.f32 %v1871, %v1872
      %v1874 = vand.u32 %v1873, 4294901760
      %1875 = vmatpush1.msra.mxu0 %v1874
      %1876 = vmatprep.subr.mxu0 0.0
      %1877 = vmatpush1.msra.mxu0 0.0
      %1878 = vmatprep.subr.mxu0 0.0
      %1879 = vmatpush1.msra.mxu0 0.0
      %1880 = vmatprep.subr.mxu0 0.0
      %1881 = vmatpush1.msra.mxu0 0.0
      %1882 = vmatprep.subr.mxu0 0.0
      %1883 = vmatpush1.msra.mxu0 0.0
      %1884 = vmatprep.subr.mxu0 0.0
      %1885 = vmatpush1.msra.mxu0 0.0
      %1886 = vmatprep.subr.mxu0 0.0
      %1887 = vmatpush1.msra.mxu0 0.0
      %1888 = vmatprep.subr.mxu0 0.0
      %1889 = vmatpush1.msra.mxu0 0.0
      %1890 = vmatprep.subr.mxu0 0.0
      %1891 = vmatpush1.msra.mxu0 0.0
      %1892 = vmatprep.subr.mxu0 0.0
      %1893 = vmatpush1.msra.mxu0 0.0
      %1894 = vmatprep.subr.mxu0 0.0
      %1895 = vmatpush1.msra.mxu0 0.0
      %1896 = vmatprep.subr.mxu0 0.0
      %1897 = vmatpush1.msra.mxu0 0.0
      %1898 = vmatprep.subr.mxu0 0.0
      %1899 = vmatpush1.msra.mxu0 0.0
      %1900 = vmatprep.subr.mxu0 0.0
      %1901 = vmatpush1.msra.mxu0 0.0
      %1902 = vmatprep.subr.mxu0 0.0
      %1903 = vmatpush1.msra.mxu0 0.0
      %1904 = vmatprep.subr.mxu0 0.0
      %1905 = vmatpush1.msra.mxu0 0.0
      %1906 = vmatprep.subr.mxu0 0.0
      %1907 = vmatpush1.msra.mxu0 0.0
      %1908 = vmatprep.mubr.f32.mxu0 0.0
      %v1909 = vand.u32 %v1649, 4294901760
      %1910 = vmatmul.mubr.f32.gmra.mrb[0].mxu0 %v1909
      %v1911 = vpop.f32.mrb[0].mxu0
      %v1912 = vadd.f32 %v1761, %v1911
      %v1913 = vpop.f32.mrb[0].mxu0
      %1914 = vdwg.mxu0
      %1915 = vmatprep.subr.mxu0 0.0
      %v1916 = vand.u32 %v1650, 4294901760
      %v1917 = vsub.f32 %v1650, %v1916
      %1918 = vmatpush1.msra.mxu0 %v1917
      %1919 = vmatprep.subr.mxu0 0.0
      %v1920 = vand.u32 %v1651, 4294901760
      %v1921 = vsub.f32 %v1651, %v1920
      %1922 = vmatpush1.msra.mxu0 %v1921
      %1923 = vmatprep.subr.mxu0 0.0
      %v1924 = vand.u32 %v1652, 4294901760
      %v1925 = vsub.f32 %v1652, %v1924
      %1926 = vmatpush1.msra.mxu0 %v1925
      %1927 = vmatprep.subr.mxu0 0.0
      %v1928 = vand.u32 %v1653, 4294901760
      %v1929 = vsub.f32 %v1653, %v1928
      %1930 = vmatpush1.msra.mxu0 %v1929
      %1931 = vmatprep.subr.mxu0 0.0
      %v1932 = vand.u32 %v1654, 4294901760
      %v1933 = vsub.f32 %v1654, %v1932
      %1934 = vmatpush1.msra.mxu0 %v1933
      %1935 = vmatprep.subr.mxu0 0.0
      %v1936 = vand.u32 %v1655, 4294901760
      %v1937 = vsub.f32 %v1655, %v1936
      %1938 = vmatpush1.msra.mxu0 %v1937
      %1939 = vmatprep.subr.mxu0 0.0
      %v1940 = vand.u32 %v1656, 4294901760
      %v1941 = vsub.f32 %v1656, %v1940
      %1942 = vmatpush1.msra.mxu0 %v1941
      %1943 = vmatprep.subr.mxu0 0.0
      %v1944 = vand.u32 %v1657, 4294901760
      %v1945 = vsub.f32 %v1657, %v1944
      %1946 = vmatpush1.msra.mxu0 %v1945
      %1947 = vmatprep.subr.mxu0 0.0
      %v1948 = vand.u32 %v1658, 4294901760
      %v1949 = vsub.f32 %v1658, %v1948
      %1950 = vmatpush1.msra.mxu0 %v1949
      %1951 = vmatprep.subr.mxu0 0.0
      %v1952 = vand.u32 %v1659, 4294901760
      %v1953 = vsub.f32 %v1659, %v1952
      %1954 = vmatpush1.msra.mxu0 %v1953
      %1955 = vmatprep.subr.mxu0 0.0
      %v1956 = vand.u32 %v1660, 4294901760
      %v1957 = vsub.f32 %v1660, %v1956
      %1958 = vmatpush1.msra.mxu0 %v1957
      %1959 = vmatprep.subr.mxu0 0.0
      %v1960 = vand.u32 %v1661, 4294901760
      %v1961 = vsub.f32 %v1661, %v1960
      %1962 = vmatpush1.msra.mxu0 %v1961
      %1963 = vmatprep.subr.mxu0 0.0
      %v1964 = vand.u32 %v1662, 4294901760
      %v1965 = vsub.f32 %v1662, %v1964
      %1966 = vmatpush1.msra.mxu0 %v1965
      %1967 = vmatprep.subr.mxu0 0.0
      %v1968 = vand.u32 %v1663, 4294901760
      %v1969 = vsub.f32 %v1663, %v1968
      %1970 = vmatpush1.msra.mxu0 %v1969
      %1971 = vmatprep.subr.mxu0 0.0
      %v1972 = vand.u32 %v1664, 4294901760
      %v1973 = vsub.f32 %v1664, %v1972
      %1974 = vmatpush1.msra.mxu0 %v1973
      %1975 = vmatprep.subr.mxu0 0.0
      %v1976 = vand.u32 %v1665, 4294901760
      %v1977 = vsub.f32 %v1665, %v1976
      %1978 = vmatpush1.msra.mxu0 %v1977
      %1979 = vmatprep.subr.mxu0 0.0
      %1980 = vmatpush1.msra.mxu0 0.0
      %1981 = vmatprep.subr.mxu0 0.0
      %1982 = vmatpush1.msra.mxu0 0.0
      %1983 = vmatprep.subr.mxu0 0.0
      %1984 = vmatpush1.msra.mxu0 0.0
      %1985 = vmatprep.subr.mxu0 0.0
      %1986 = vmatpush1.msra.mxu0 0.0
      %1987 = vmatprep.subr.mxu0 0.0
      %1988 = vmatpush1.msra.mxu0 0.0
      %1989 = vmatprep.subr.mxu0 0.0
      %1990 = vmatpush1.msra.mxu0 0.0
      %1991 = vmatprep.subr.mxu0 0.0
      %1992 = vmatpush1.msra.mxu0 0.0
      %1993 = vmatprep.subr.mxu0 0.0
      %1994 = vmatpush1.msra.mxu0 0.0
      %1995 = vmatprep.subr.mxu0 0.0
      %1996 = vmatpush1.msra.mxu0 0.0
      %1997 = vmatprep.subr.mxu0 0.0
      %1998 = vmatpush1.msra.mxu0 0.0
      %1999 = vmatprep.subr.mxu0 0.0
      %2000 = vmatpush1.msra.mxu0 0.0
      %2001 = vmatprep.subr.mxu0 0.0
      %2002 = vmatpush1.msra.mxu0 0.0
      %2003 = vmatprep.subr.mxu0 0.0
      %2004 = vmatpush1.msra.mxu0 0.0
      %2005 = vmatprep.subr.mxu0 0.0
      %2006 = vmatpush1.msra.mxu0 0.0
      %2007 = vmatprep.subr.mxu0 0.0
      %2008 = vmatpush1.msra.mxu0 0.0
      %2009 = vmatprep.subr.mxu0 0.0
      %2010 = vmatpush1.msra.mxu0 0.0
      %2011 = vmatprep.mubr.f32.mxu0 0.0
      %v2012 = vand.u32 %v1649, 4294901760
      %v2013 = vsub.f32 %v1649, %v2012
      %2014 = vmatmul.mubr.f32.gmra.mrb[0].mxu0 %v2013
      %v2015 = vpop.f32.mrb[0].mxu0
      %v2016 = vadd.f32 %v1912, %v2015
      %v2017 = vpop.f32.mrb[0].mxu0
      %2018 = vdwg.mxu0
      %2019 = vmatprep.subr.mxu0 0.0
      %v2020 = vand.u32 %v1650, 4294901760
      %2021 = vmatpush1.msra.mxu0 %v2020
      %2022 = vmatprep.subr.mxu0 0.0
      %v2023 = vand.u32 %v1651, 4294901760
      %2024 = vmatpush1.msra.mxu0 %v2023
      %2025 = vmatprep.subr.mxu0 0.0
      %v2026 = vand.u32 %v1652, 4294901760
      %2027 = vmatpush1.msra.mxu0 %v2026
      %2028 = vmatprep.subr.mxu0 0.0
      %v2029 = vand.u32 %v1653, 4294901760
      %2030 = vmatpush1.msra.mxu0 %v2029
      %2031 = vmatprep.subr.mxu0 0.0
      %v2032 = vand.u32 %v1654, 4294901760
      %2033 = vmatpush1.msra.mxu0 %v2032
      %2034 = vmatprep.subr.mxu0 0.0
      %v2035 = vand.u32 %v1655, 4294901760
      %2036 = vmatpush1.msra.mxu0 %v2035
      %2037 = vmatprep.subr.mxu0 0.0
      %v2038 = vand.u32 %v1656, 4294901760
      %2039 = vmatpush1.msra.mxu0 %v2038
      %2040 = vmatprep.subr.mxu0 0.0
      %v2041 = vand.u32 %v1657, 4294901760
      %2042 = vmatpush1.msra.mxu0 %v2041
      %2043 = vmatprep.subr.mxu0 0.0
      %v2044 = vand.u32 %v1658, 4294901760
      %2045 = vmatpush1.msra.mxu0 %v2044
      %2046 = vmatprep.subr.mxu0 0.0
      %v2047 = vand.u32 %v1659, 4294901760
      %2048 = vmatpush1.msra.mxu0 %v2047
      %2049 = vmatprep.subr.mxu0 0.0
      %v2050 = vand.u32 %v1660, 4294901760
      %2051 = vmatpush1.msra.mxu0 %v2050
      %2052 = vmatprep.subr.mxu0 0.0
      %v2053 = vand.u32 %v1661, 4294901760
      %2054 = vmatpush1.msra.mxu0 %v2053
      %2055 = vmatprep.subr.mxu0 0.0
      %v2056 = vand.u32 %v1662, 4294901760
      %2057 = vmatpush1.msra.mxu0 %v2056
      %2058 = vmatprep.subr.mxu0 0.0
      %v2059 = vand.u32 %v1663, 4294901760
      %2060 = vmatpush1.msra.mxu0 %v2059
      %2061 = vmatprep.subr.mxu0 0.0
      %v2062 = vand.u32 %v1664, 4294901760
      %2063 = vmatpush1.msra.mxu0 %v2062
      %2064 = vmatprep.subr.mxu0 0.0
      %v2065 = vand.u32 %v1665, 4294901760
      %2066 = vmatpush1.msra.mxu0 %v2065
      %2067 = vmatprep.subr.mxu0 0.0
      %2068 = vmatpush1.msra.mxu0 0.0
      %2069 = vmatprep.subr.mxu0 0.0
      %2070 = vmatpush1.msra.mxu0 0.0
      %2071 = vmatprep.subr.mxu0 0.0
      %2072 = vmatpush1.msra.mxu0 0.0
      %2073 = vmatprep.subr.mxu0 0.0
      %2074 = vmatpush1.msra.mxu0 0.0
      %2075 = vmatprep.subr.mxu0 0.0
      %2076 = vmatpush1.msra.mxu0 0.0
      %2077 = vmatprep.subr.mxu0 0.0
      %2078 = vmatpush1.msra.mxu0 0.0
      %2079 = vmatprep.subr.mxu0 0.0
      %2080 = vmatpush1.msra.mxu0 0.0
      %2081 = vmatprep.subr.mxu0 0.0
      %2082 = vmatpush1.msra.mxu0 0.0
      %2083 = vmatprep.subr.mxu0 0.0
      %2084 = vmatpush1.msra.mxu0 0.0
      %2085 = vmatprep.subr.mxu0 0.0
      %2086 = vmatpush1.msra.mxu0 0.0
      %2087 = vmatprep.subr.mxu0 0.0
      %2088 = vmatpush1.msra.mxu0 0.0
      %2089 = vmatprep.subr.mxu0 0.0
      %2090 = vmatpush1.msra.mxu0 0.0
      %2091 = vmatprep.subr.mxu0 0.0
      %2092 = vmatpush1.msra.mxu0 0.0
      %2093 = vmatprep.subr.mxu0 0.0
      %2094 = vmatpush1.msra.mxu0 0.0
      %2095 = vmatprep.subr.mxu0 0.0
      %2096 = vmatpush1.msra.mxu0 0.0
      %2097 = vmatprep.subr.mxu0 0.0
      %2098 = vmatpush1.msra.mxu0 0.0
      %2099 = vmatprep.mubr.f32.mxu0 0.0
      %v2100 = vand.u32 %v1649, 4294901760
      %v2101 = vsub.f32 %v1649, %v2100
      %v2102 = vand.u32 %v2101, 4294901760
      %2103 = vmatmul.mubr.f32.gmra.mrb[0].mxu0 %v2102
      %v2104 = vpop.f32.mrb[0].mxu0
      %v2105 = vadd.f32 %v2016, %v2104
      %v2106 = vpop.f32.mrb[0].mxu0
      %2107 = vdwg.mxu0
      %2108 = vmatprep.subr.mxu0 0.0
      %v2109 = vand.u32 %v1650, 4294901760
      %v2110 = vsub.f32 %v1650, %v2109
      %v2111 = vand.u32 %v2110, 4294901760
      %2112 = vmatpush1.msra.mxu0 %v2111
      %2113 = vmatprep.subr.mxu0 0.0
      %v2114 = vand.u32 %v1651, 4294901760
      %v2115 = vsub.f32 %v1651, %v2114
      %v2116 = vand.u32 %v2115, 4294901760
      %2117 = vmatpush1.msra.mxu0 %v2116
      %2118 = vmatprep.subr.mxu0 0.0
      %v2119 = vand.u32 %v1652, 4294901760
      %v2120 = vsub.f32 %v1652, %v2119
      %v2121 = vand.u32 %v2120, 4294901760
      %2122 = vmatpush1.msra.mxu0 %v2121
      %2123 = vmatprep.subr.mxu0 0.0
      %v2124 = vand.u32 %v1653, 4294901760
      %v2125 = vsub.f32 %v1653, %v2124
      %v2126 = vand.u32 %v2125, 4294901760
      %2127 = vmatpush1.msra.mxu0 %v2126
      %2128 = vmatprep.subr.mxu0 0.0
      %v2129 = vand.u32 %v1654, 4294901760
      %v2130 = vsub.f32 %v1654, %v2129
      %v2131 = vand.u32 %v2130, 4294901760
      %2132 = vmatpush1.msra.mxu0 %v2131
      %2133 = vmatprep.subr.mxu0 0.0
      %v2134 = vand.u32 %v1655, 4294901760
      %v2135 = vsub.f32 %v1655, %v2134
      %v2136 = vand.u32 %v2135, 4294901760
      %2137 = vmatpush1.msra.mxu0 %v2136
      %2138 = vmatprep.subr.mxu0 0.0
      %v2139 = vand.u32 %v1656, 4294901760
      %v2140 = vsub.f32 %v1656, %v2139
      %v2141 = vand.u32 %v2140, 4294901760
      %2142 = vmatpush1.msra.mxu0 %v2141
      %2143 = vmatprep.subr.mxu0 0.0
      %v2144 = vand.u32 %v1657, 4294901760
      %v2145 = vsub.f32 %v1657, %v2144
      %v2146 = vand.u32 %v2145, 4294901760
      %2147 = vmatpush1.msra.mxu0 %v2146
      %2148 = vmatprep.subr.mxu0 0.0
      %v2149 = vand.u32 %v1658, 4294901760
      %v2150 = vsub.f32 %v1658, %v2149
      %v2151 = vand.u32 %v2150, 4294901760
      %2152 = vmatpush1.msra.mxu0 %v2151
      %2153 = vmatprep.subr.mxu0 0.0
      %v2154 = vand.u32 %v1659, 4294901760
      %v2155 = vsub.f32 %v1659, %v2154
      %v2156 = vand.u32 %v2155, 4294901760
      %2157 = vmatpush1.msra.mxu0 %v2156
      %2158 = vmatprep.subr.mxu0 0.0
      %v2159 = vand.u32 %v1660, 4294901760
      %v2160 = vsub.f32 %v1660, %v2159
      %v2161 = vand.u32 %v2160, 4294901760
      %2162 = vmatpush1.msra.mxu0 %v2161
      %2163 = vmatprep.subr.mxu0 0.0
      %v2164 = vand.u32 %v1661, 4294901760
      %v2165 = vsub.f32 %v1661, %v2164
      %v2166 = vand.u32 %v2165, 4294901760
      %2167 = vmatpush1.msra.mxu0 %v2166
      %2168 = vmatprep.subr.mxu0 0.0
      %v2169 = vand.u32 %v1662, 4294901760
      %v2170 = vsub.f32 %v1662, %v2169
      %v2171 = vand.u32 %v2170, 4294901760
      %2172 = vmatpush1.msra.mxu0 %v2171
      %2173 = vmatprep.subr.mxu0 0.0
      %v2174 = vand.u32 %v1663, 4294901760
      %v2175 = vsub.f32 %v1663, %v2174
      %v2176 = vand.u32 %v2175, 4294901760
      %2177 = vmatpush1.msra.mxu0 %v2176
      %2178 = vmatprep.subr.mxu0 0.0
      %v2179 = vand.u32 %v1664, 4294901760
      %v2180 = vsub.f32 %v1664, %v2179
      %v2181 = vand.u32 %v2180, 4294901760
      %2182 = vmatpush1.msra.mxu0 %v2181
      %2183 = vmatprep.subr.mxu0 0.0
      %v2184 = vand.u32 %v1665, 4294901760
      %v2185 = vsub.f32 %v1665, %v2184
      %v2186 = vand.u32 %v2185, 4294901760
      %2187 = vmatpush1.msra.mxu0 %v2186
      %2188 = vmatprep.subr.mxu0 0.0
      %2189 = vmatpush1.msra.mxu0 0.0
      %2190 = vmatprep.subr.mxu0 0.0
      %2191 = vmatpush1.msra.mxu0 0.0
      %2192 = vmatprep.subr.mxu0 0.0
      %2193 = vmatpush1.msra.mxu0 0.0
      %2194 = vmatprep.subr.mxu0 0.0
      %2195 = vmatpush1.msra.mxu0 0.0
      %2196 = vmatprep.subr.mxu0 0.0
      %2197 = vmatpush1.msra.mxu0 0.0
      %2198 = vmatprep.subr.mxu0 0.0
      %2199 = vmatpush1.msra.mxu0 0.0
      %2200 = vmatprep.subr.mxu0 0.0
      %2201 = vmatpush1.msra.mxu0 0.0
      %2202 = vmatprep.subr.mxu0 0.0
      %2203 = vmatpush1.msra.mxu0 0.0
      %2204 = vmatprep.subr.mxu0 0.0
      %2205 = vmatpush1.msra.mxu0 0.0
      %2206 = vmatprep.subr.mxu0 0.0
      %2207 = vmatpush1.msra.mxu0 0.0
      %2208 = vmatprep.subr.mxu0 0.0
      %2209 = vmatpush1.msra.mxu0 0.0
      %2210 = vmatprep.subr.mxu0 0.0
      %2211 = vmatpush1.msra.mxu0 0.0
      %2212 = vmatprep.subr.mxu0 0.0
      %2213 = vmatpush1.msra.mxu0 0.0
      %2214 = vmatprep.subr.mxu0 0.0
      %2215 = vmatpush1.msra.mxu0 0.0
      %2216 = vmatprep.subr.mxu0 0.0
      %2217 = vmatpush1.msra.mxu0 0.0
      %2218 = vmatprep.subr.mxu0 0.0
      %2219 = vmatpush1.msra.mxu0 0.0
      %2220 = vmatprep.mubr.f32.mxu0 0.0
      %v2221 = vand.u32 %v1649, 4294901760
      %2222 = vmatmul.mubr.f32.gmra.mrb[0].mxu0 %v2221
      %v2223 = vpop.f32.mrb[0].mxu0
      %v2224 = vadd.f32 %v2105, %v2223
      %v2225 = vpop.f32.mrb[0].mxu0
      %2226 = vdwg.mxu0
      %2227 = vmatprep.subr.mxu0 0.0
      %v2228 = vand.u32 %v1650, 4294901760
      %2229 = vmatpush1.msra.mxu0 %v2228
      %2230 = vmatprep.subr.mxu0 0.0
      %v2231 = vand.u32 %v1651, 4294901760
      %2232 = vmatpush1.msra.mxu0 %v2231
      %2233 = vmatprep.subr.mxu0 0.0
      %v2234 = vand.u32 %v1652, 4294901760
      %2235 = vmatpush1.msra.mxu0 %v2234
      %2236 = vmatprep.subr.mxu0 0.0
      %v2237 = vand.u32 %v1653, 4294901760
      %2238 = vmatpush1.msra.mxu0 %v2237
      %2239 = vmatprep.subr.mxu0 0.0
      %v2240 = vand.u32 %v1654, 4294901760
      %2241 = vmatpush1.msra.mxu0 %v2240
      %2242 = vmatprep.subr.mxu0 0.0
      %v2243 = vand.u32 %v1655, 4294901760
      %2244 = vmatpush1.msra.mxu0 %v2243
      %2245 = vmatprep.subr.mxu0 0.0
      %v2246 = vand.u32 %v1656, 4294901760
      %2247 = vmatpush1.msra.mxu0 %v2246
      %2248 = vmatprep.subr.mxu0 0.0
      %v2249 = vand.u32 %v1657, 4294901760
      %2250 = vmatpush1.msra.mxu0 %v2249
      %2251 = vmatprep.subr.mxu0 0.0
      %v2252 = vand.u32 %v1658, 4294901760
      %2253 = vmatpush1.msra.mxu0 %v2252
      %2254 = vmatprep.subr.mxu0 0.0
      %v2255 = vand.u32 %v1659, 4294901760
      %2256 = vmatpush1.msra.mxu0 %v2255
      %2257 = vmatprep.subr.mxu0 0.0
      %v2258 = vand.u32 %v1660, 4294901760
      %2259 = vmatpush1.msra.mxu0 %v2258
      %2260 = vmatprep.subr.mxu0 0.0
      %v2261 = vand.u32 %v1661, 4294901760
      %2262 = vmatpush1.msra.mxu0 %v2261
      %2263 = vmatprep.subr.mxu0 0.0
      %v2264 = vand.u32 %v1662, 4294901760
      %2265 = vmatpush1.msra.mxu0 %v2264
      %2266 = vmatprep.subr.mxu0 0.0
      %v2267 = vand.u32 %v1663, 4294901760
      %2268 = vmatpush1.msra.mxu0 %v2267
      %2269 = vmatprep.subr.mxu0 0.0
      %v2270 = vand.u32 %v1664, 4294901760
      %2271 = vmatpush1.msra.mxu0 %v2270
      %2272 = vmatprep.subr.mxu0 0.0
      %v2273 = vand.u32 %v1665, 4294901760
      %2274 = vmatpush1.msra.mxu0 %v2273
      %2275 = vmatprep.subr.mxu0 0.0
      %2276 = vmatpush1.msra.mxu0 0.0
      %2277 = vmatprep.subr.mxu0 0.0
      %2278 = vmatpush1.msra.mxu0 0.0
      %2279 = vmatprep.subr.mxu0 0.0
      %2280 = vmatpush1.msra.mxu0 0.0
      %2281 = vmatprep.subr.mxu0 0.0
      %2282 = vmatpush1.msra.mxu0 0.0
      %2283 = vmatprep.subr.mxu0 0.0
      %2284 = vmatpush1.msra.mxu0 0.0
      %2285 = vmatprep.subr.mxu0 0.0
      %2286 = vmatpush1.msra.mxu0 0.0
      %2287 = vmatprep.subr.mxu0 0.0
      %2288 = vmatpush1.msra.mxu0 0.0
      %2289 = vmatprep.subr.mxu0 0.0
      %2290 = vmatpush1.msra.mxu0 0.0
      %2291 = vmatprep.subr.mxu0 0.0
      %2292 = vmatpush1.msra.mxu0 0.0
      %2293 = vmatprep.subr.mxu0 0.0
      %2294 = vmatpush1.msra.mxu0 0.0
      %2295 = vmatprep.subr.mxu0 0.0
      %2296 = vmatpush1.msra.mxu0 0.0
      %2297 = vmatprep.subr.mxu0 0.0
      %2298 = vmatpush1.msra.mxu0 0.0
      %2299 = vmatprep.subr.mxu0 0.0
      %2300 = vmatpush1.msra.mxu0 0.0
      %2301 = vmatprep.subr.mxu0 0.0
      %2302 = vmatpush1.msra.mxu0 0.0
      %2303 = vmatprep.subr.mxu0 0.0
      %2304 = vmatpush1.msra.mxu0 0.0
      %2305 = vmatprep.subr.mxu0 0.0
      %2306 = vmatpush1.msra.mxu0 0.0
      %2307 = vmatprep.mubr.f32.mxu0 0.0
      %v2308 = vand.u32 %v1649, 4294901760
      %2309 = vmatmul.mubr.f32.gmra.mrb[0].mxu0 %v2308
      %v2310 = vpop.f32.mrb[0].mxu0
      %v2311 = vadd.f32 %v2224, %v2310
      %v2312 = vpop.f32.mrb[0].mxu0
      %2313 = vdwg.mxu0
      %vm2314 = vcmask 9216
      %v2315 = vsel %vm2314, %v2311, -inf
      %2316 = vmax.xlane.f32.xlu0 %v2315
      %v2317 = vpop.xlane.xlu0 %2316
      %v2318 = vsub.f32 %v2311, %v2317
      %v2319 = vmul.f32 %v2318, 1.442695
      %v2320 = vpow.pop %v2319
      %v2321 = vsel %vm2314, %v2320, 0.0
      %2322 = vadd.xlane.f32.xlu0 %v2321
      %v2323 = vpop.xlane.xlu0 %2322
      %v2324 = vlog2.pop %v2323
      %v2325 = vmul.f32 %v2324, 0.6931472
      %v2326 = vadd.f32 %v2325, %v2317
      %v2327 = vsub.f32 %v2311, %v2326
      %2328 = vst.msk [vmem:[#allocation3] sm:$0x3] %vm2314, %v2327
    $region45: #{dsc_classifier_forward.1} parent=1 // pred_fallthru
      _
    // Predicated region
    $region46: #{dsc_classifier_forward.1} parent=1 // pred_check
      _
    $region47: #{dsc_classifier_forward.1} parent=1 // pred_check_branch
      %2330 = sbr.rel (0) target = $region49
    $region48: #{dsc_classifier_forward.1} parent=1 // pred_region
      %s2332 = ssub.s32 32, 32
      %2333 = vsyncadd [#allocation4], %s2332
      %s2335 = sshll.u32 [#allocation3], 4
      %s2336 = int_to_ptr.vmem [resolvable:$true] %s2335
      %2338 = dma.vmem_to_hbm [thread:$0]  %s2336, 32, %s9, [#allocation4]
    $region49: #{dsc_classifier_forward.1} parent=1 // pred_fallthru
      _
    // Predicated region
    $region50: #{dsc_classifier_forward.1} parent=1 // pred_check
      _
    $region51: #{dsc_classifier_forward.1} parent=1 // pred_check_branch
      %2340 = sbr.rel (0) target = $region53
    $region52: #{dsc_classifier_forward.1} parent=1 // pred_region
      %2341 = dma.done [#allocation4], 32
    $region53: #{dsc_classifier_forward.1} parent=1 // pred_fallthru
      _
    %2342 = vsyncpa [#allocation4], 1

</llo_original>
